<compile_context>
chip_gen: v7x
topology: tpu7x:2x2x1
jax: 0.10.0
libtpu: 0.0.40
codegen_flags: <defaults>
</compile_context>

<pallas_src>
import jax
import jax.numpy as jnp
from jax.experimental import pallas as pl
from jax.experimental.pallas import tpu as pltpu

EPS = 1e-5  # nn.InstanceNorm1d default eps


# ----------------------------------------------------------------------------
# Kernel
# ----------------------------------------------------------------------------
def _inst_norm(y, gamma, beta, inv_n):
    # InstanceNorm1d over the node axis (axis 0 of the (N, D) tile), biased
    # variance, single pass: mean and E[y^2] from one traversal.
    mean = jnp.sum(y, axis=0, keepdims=True) * inv_n
    sq = jnp.sum(y * y, axis=0, keepdims=True) * inv_n
    var = sq - mean * mean
    return (y - mean) * jax.lax.rsqrt(var + EPS) * gamma + beta


def tsp_encoder_kernel(alphas_ref,                 # SMEM (L,)  alpha_l * (-log_scale)
                       data_ref, dist_ref,         # (1,N,2), (1,N,N)
                       emb_w_ref, emb_b_ref,       # (2,D), (1,D)
                       wqkv_ref,                   # (L,3,D,D)
                       g1_ref, b1_ref,             # (L,1,D) norm1 affine
                       w1_ref, bf1_ref,            # (L,D,F), (L,1,F)
                       w2_ref, bf2_ref,            # (L,F,D), (L,1,D)
                       g2_ref, b2_ref,             # (L,1,D) norm2 affine
                       o_ref):                     # (1,N,D)
    coords = data_ref[0]                           # (N, 2)
    dist = dist_ref[0]                             # (N, N)
    n_nodes = coords.shape[0]
    L = wqkv_ref.shape[0]
    inv_n = 1.0 / n_nodes

    # --- Embedding: Linear(2, D) as two broadcast FMAs (avoid K=2 MXU push) ---
    w_emb = emb_w_ref[...]                         # (2, D)
    x = (coords[:, 0:1] * w_emb[0:1, :]
         + coords[:, 1:2] * w_emb[1:2, :]
         + emb_b_ref[...])                         # (N, D)

    # --- Encoder layers (unrolled; weights resident in VMEM) ---
    for l in range(L):
        neg_alpha_ls = alphas_ref[l]               # scalar: alpha_l * (-log_scale)

        # Q/K/V projections (no bias).  Three lane-aligned MXU dots.
        q = jnp.dot(x, wqkv_ref[l, 0], preferred_element_type=jnp.float32)
        k = jnp.dot(x, wqkv_ref[l, 1], preferred_element_type=jnp.float32)
        v = jnp.dot(x, wqkv_ref[l, 2], preferred_element_type=jnp.float32)

        # --- Adaptation Attention Free Module ---
        bias = neg_alpha_ls * dist                 # (N, N) adaptation bias
        # Ratio-invariant stabilization: subtracting a per-row constant from the
        # bias and a per-column constant from k rescales num and den identically
        # so the ratio matches the reference non-overflow path exactly.
        # TODO(synk): torch.nan_to_num overflow branch is replaced by this
        # stabilization; only differs when the reference itself overflows.
        bias = bias - jnp.max(bias, axis=-1, keepdims=True)
        k = k - jnp.max(k, axis=0, keepdims=True)
        eb = jnp.exp(bias)                         # (N, N)
        ek = jnp.exp(k)                            # (N, D)

        num = jnp.dot(eb, ek * v, preferred_element_type=jnp.float32)   # (N, D)
        den = jnp.dot(eb, ek, preferred_element_type=jnp.float32)       # (N, D)
        aafm = jax.nn.sigmoid(q) * (num * pl.reciprocal(den, approx=True))

        # --- Add & InstanceNorm 1 ---
        out1 = _inst_norm(x + aafm, g1_ref[l], b1_ref[l], inv_n)

        # --- Feed forward: W2(relu(W1(out1))) ---
        h = jnp.dot(out1, w1_ref[l], preferred_element_type=jnp.float32) + bf1_ref[l]
        h = jnp.maximum(h, 0.0)
        out2 = jnp.dot(h, w2_ref[l], preferred_element_type=jnp.float32) + bf2_ref[l]

        # --- Add & InstanceNorm 2 ---
        x = _inst_norm(out1 + out2, g2_ref[l], b2_ref[l], inv_n)

    o_ref[0] = x


# ----------------------------------------------------------------------------
# Wrapper
# ----------------------------------------------------------------------------
def tsp_encoder_forward(data, dist, log_scale, params):
    B, N, _ = data.shape
    L = params["wqkv"].shape[0]
    D = params["wqkv"].shape[2]
    F_dim = params["w1"].shape[2]

    # Fold -log_scale into alpha on the host; dist is passed straight through.
    neg_alpha_ls = (params["alpha"] * (-float(log_scale))).astype(jnp.float32)

    return pl.pallas_call(
        tsp_encoder_kernel,
        out_shape=jax.ShapeDtypeStruct((B, N, D), jnp.float32),
        grid=(B,),
        in_specs=[
            pl.BlockSpec(memory_space=pltpu.MemorySpace.SMEM),      # alphas (L,)
            pl.BlockSpec((1, N, 2), lambda b: (b, 0, 0)),           # data
            pl.BlockSpec((1, N, N), lambda b: (b, 0, 0)),           # dist
            pl.BlockSpec((2, D), lambda b: (0, 0)),                 # emb_w
            pl.BlockSpec((1, D), lambda b: (0, 0)),                 # emb_b
            pl.BlockSpec((L, 3, D, D), lambda b: (0, 0, 0, 0)),     # Wq/Wk/Wv
            pl.BlockSpec((L, 1, D), lambda b: (0, 0, 0)),           # norm1 gamma
            pl.BlockSpec((L, 1, D), lambda b: (0, 0, 0)),           # norm1 beta
            pl.BlockSpec((L, D, F_dim), lambda b: (0, 0, 0)),       # W1
            pl.BlockSpec((L, 1, F_dim), lambda b: (0, 0, 0)),       # b1
            pl.BlockSpec((L, F_dim, D), lambda b: (0, 0, 0)),       # W2
            pl.BlockSpec((L, 1, D), lambda b: (0, 0, 0)),           # b2
            pl.BlockSpec((L, 1, D), lambda b: (0, 0, 0)),           # norm2 gamma
            pl.BlockSpec((L, 1, D), lambda b: (0, 0, 0)),           # norm2 beta
        ],
        out_specs=pl.BlockSpec((1, N, D), lambda b: (b, 0, 0)),
        compiler_params=pltpu.CompilerParams(
            dimension_semantics=("parallel",)),
    )(neg_alpha_ls, data, dist,
      params["emb_w"], params["emb_b"],
      params["wqkv"],
      params["g1"], params["b1"],
      params["w1"], params["bf1"], params["w2"], params["bf2"],
      params["g2"], params["b2"])


def init_params(key, embedding_dim, ff_hidden_dim, encoder_layer_num):
    D, F, L = embedding_dim, ff_hidden_dim, encoder_layer_num

    def lin(k, fan_in, fan_out):
        return (jax.random.normal(k, (fan_in, fan_out), jnp.float32)
                / jnp.sqrt(float(fan_in)))

    keys = jax.random.split(key, 2 + 7 * L)
    params = {
        "emb_w": lin(keys[0], 2, D),
        "emb_b": jax.random.normal(keys[1], (1, D), jnp.float32) * 0.02,
        "alpha": jnp.ones((L,), jnp.float32),            # nn.Parameter([1.0]) per layer
        "g1": jnp.ones((L, 1, D), jnp.float32),          # InstanceNorm affine=True
        "b1": jnp.zeros((L, 1, D), jnp.float32),
        "g2": jnp.ones((L, 1, D), jnp.float32),
        "b2": jnp.zeros((L, 1, D), jnp.float32),
    }
    wqkv, w1, bf1, w2, bf2 = [], [], [], [], []
    for li in range(L):
        ks = keys[2 + 7 * li: 2 + 7 * (li + 1)]
        wq, wk, wv = lin(ks[0], D, D), lin(ks[1], D, D), lin(ks[2], D, D)
        wqkv.append(jnp.stack([wq, wk, wv], axis=0))      # (3, D, D)
        w1.append(lin(ks[3], D, F))
        bf1.append(jax.random.normal(ks[4], (1, F), jnp.float32) * 0.02)
        w2.append(lin(ks[5], F, D))
        bf2.append(jax.random.normal(ks[6], (1, D), jnp.float32) * 0.02)
    params["wqkv"] = jnp.stack(wqkv)    # (L, 3, D, D)
    params["w1"] = jnp.stack(w1)        # (L, D, F)
    params["bf1"] = jnp.stack(bf1)      # (L, 1, F)
    params["w2"] = jnp.stack(w2)        # (L, F, D)
    params["bf2"] = jnp.stack(bf2)      # (L, 1, D)
    return params


# ----------------------------------------------------------------------------
# Main
# ----------------------------------------------------------------------------
if __name__ == "__main__":
    B, N = 2, 8                 # batch, number of TSP nodes
    D, F = 32, 64               # embedding_dim, ff_hidden_dim
    L = 2                       # encoder_layer_num

    key = jax.random.PRNGKey(0)
    k_data, k_params = jax.random.split(key)

    data = jax.random.uniform(k_data, (B, N, 2), jnp.float32)        # coords in [0,1)
    diff = data[:, :, None, :] - data[:, None, :, :]
    dist = jnp.sqrt(jnp.sum(diff * diff, axis=-1) + 1e-12)           # (B, N, N)
    log_scale = float(jnp.log2(float(N)))

    params = init_params(k_params, D, F, L)

    out = tsp_encoder_forward(data, dist, log_scale, params)
    out = jax.block_until_ready(out)
    assert out.shape == (B, N, D)
    assert bool(jnp.all(jnp.isfinite(out)))
    print("KERNEL_OK")
</pallas_src>

<mosaic_0001>
module attributes {stable_mosaic.version = 11 : i64} {
  func.func @tsp_encoder_kernel(%arg0: i32, %arg1: memref<2xf32, #tpu.memory_space<smem>>, %arg2: memref<1x8x2xf32, #tpu.memory_space<vmem>>, %arg3: memref<1x8x8xf32, #tpu.memory_space<vmem>>, %arg4: memref<2x32xf32, #tpu.memory_space<vmem>>, %arg5: memref<1x32xf32, #tpu.memory_space<vmem>>, %arg6: memref<2x3x32x32xf32, #tpu.memory_space<vmem>>, %arg7: memref<2x1x32xf32, #tpu.memory_space<vmem>>, %arg8: memref<2x1x32xf32, #tpu.memory_space<vmem>>, %arg9: memref<2x32x64xf32, #tpu.memory_space<vmem>>, %arg10: memref<2x1x64xf32, #tpu.memory_space<vmem>>, %arg11: memref<2x64x32xf32, #tpu.memory_space<vmem>>, %arg12: memref<2x1x32xf32, #tpu.memory_space<vmem>>, %arg13: memref<2x1x32xf32, #tpu.memory_space<vmem>>, %arg14: memref<2x1x32xf32, #tpu.memory_space<vmem>>, %arg15: memref<1x8x32xf32, #tpu.memory_space<vmem>>) attributes {dimension_semantics = [#tpu.dimension_semantics<parallel>], iteration_bounds = array<i64: 2>, scalar_prefetch = 0 : i64, scratch_operands = 0 : i64, tpu.core_type = #tpu.core_type<tc>, window_params = [{transform_indices = @transform_0, window_bounds = array<i64: 2>}, {transform_indices = @transform_1, window_bounds = array<i64: 1, 8, 2>}, {transform_indices = @transform_2, window_bounds = array<i64: 1, 8, 8>}, {pipeline_mode = #tpu.pipeline_mode<synchronous>, transform_indices = @transform_3, window_bounds = array<i64: 2, 32>}, {pipeline_mode = #tpu.pipeline_mode<synchronous>, transform_indices = @transform_4, window_bounds = array<i64: 1, 32>}, {pipeline_mode = #tpu.pipeline_mode<synchronous>, transform_indices = @transform_5, window_bounds = array<i64: 2, 3, 32, 32>}, {pipeline_mode = #tpu.pipeline_mode<synchronous>, transform_indices = @transform_6, window_bounds = array<i64: 2, 1, 32>}, {pipeline_mode = #tpu.pipeline_mode<synchronous>, transform_indices = @transform_7, window_bounds = array<i64: 2, 1, 32>}, {pipeline_mode = #tpu.pipeline_mode<synchronous>, transform_indices = @transform_8, window_bounds = array<i64: 2, 32, 64>}, {pipeline_mode = #tpu.pipeline_mode<synchronous>, transform_indices = @transform_9, window_bounds = array<i64: 2, 1, 64>}, {pipeline_mode = #tpu.pipeline_mode<synchronous>, transform_indices = @transform_10, window_bounds = array<i64: 2, 64, 32>}, {pipeline_mode = #tpu.pipeline_mode<synchronous>, transform_indices = @transform_11, window_bounds = array<i64: 2, 1, 32>}, {pipeline_mode = #tpu.pipeline_mode<synchronous>, transform_indices = @transform_12, window_bounds = array<i64: 2, 1, 32>}, {pipeline_mode = #tpu.pipeline_mode<synchronous>, transform_indices = @transform_13, window_bounds = array<i64: 2, 1, 32>}, {transform_indices = @transform_14, window_bounds = array<i64: 1, 8, 32>}]} {
    %c0 = arith.constant 0 : index
    %c0_0 = arith.constant 0 : index
    %c0_1 = arith.constant 0 : index
    %0 = vector.load %arg2[%c0, %c0_0, %c0_1] : memref<1x8x2xf32, #tpu.memory_space<vmem>>, vector<1x8x2xf32>
    %1 = vector.shape_cast %0 : vector<1x8x2xf32> to vector<8x2xf32>
    %c0_2 = arith.constant 0 : index
    %c0_3 = arith.constant 0 : index
    %c0_4 = arith.constant 0 : index
    %2 = vector.load %arg3[%c0_2, %c0_3, %c0_4] : memref<1x8x8xf32, #tpu.memory_space<vmem>>, vector<1x8x8xf32>
    %3 = vector.shape_cast %2 : vector<1x8x8xf32> to vector<8x8xf32>
    %c0_5 = arith.constant 0 : index
    %c0_6 = arith.constant 0 : index
    %4 = vector.load %arg4[%c0_5, %c0_6] : memref<2x32xf32, #tpu.memory_space<vmem>>, vector<2x32xf32>
    %5 = vector.extract_strided_slice %1 {offsets = [0, 0], sizes = [8, 1], strides = [1, 1]} : vector<8x2xf32> to vector<8x1xf32>
    %6 = vector.extract_strided_slice %4 {offsets = [0, 0], sizes = [1, 32], strides = [1, 1]} : vector<2x32xf32> to vector<1x32xf32>
    %7 = vector.broadcast %5 : vector<8x1xf32> to vector<8x32xf32>
    %8 = vector.broadcast %6 : vector<1x32xf32> to vector<8x32xf32>
    %9 = arith.mulf %7, %8 : vector<8x32xf32>
    %10 = vector.extract_strided_slice %1 {offsets = [0, 1], sizes = [8, 1], strides = [1, 1]} : vector<8x2xf32> to vector<8x1xf32>
    %11 = vector.extract_strided_slice %4 {offsets = [1, 0], sizes = [1, 32], strides = [1, 1]} : vector<2x32xf32> to vector<1x32xf32>
    %12 = vector.broadcast %10 : vector<8x1xf32> to vector<8x32xf32>
    %13 = vector.broadcast %11 : vector<1x32xf32> to vector<8x32xf32>
    %14 = arith.mulf %12, %13 : vector<8x32xf32>
    %15 = arith.addf %9, %14 : vector<8x32xf32>
    %c0_7 = arith.constant 0 : index
    %c0_8 = arith.constant 0 : index
    %16 = vector.load %arg5[%c0_7, %c0_8] : memref<1x32xf32, #tpu.memory_space<vmem>>, vector<1x32xf32>
    %17 = vector.broadcast %16 : vector<1x32xf32> to vector<8x32xf32>
    %18 = arith.addf %15, %17 : vector<8x32xf32>
    %c0_9 = arith.constant 0 : index
    %19 = memref.load %arg1[%c0_9] : memref<2xf32, #tpu.memory_space<smem>>
    %c0_10 = arith.constant 0 : index
    %c0_11 = arith.constant 0 : index
    %c0_12 = arith.constant 0 : index
    %c0_13 = arith.constant 0 : index
    %20 = vector.load %arg6[%c0_10, %c0_11, %c0_12, %c0_13] : memref<2x3x32x32xf32, #tpu.memory_space<vmem>>, vector<1x1x32x32xf32>
    %21 = vector.shape_cast %20 : vector<1x1x32x32xf32> to vector<32x32xf32>
    %cst = arith.constant dense<0.000000e+00> : vector<8x32xf32>
    %22 = tpu.matmul %18, %21, %cst {dimension_numbers = #tpu.dot_dimension_numbers<[1], [0], [0], [1], [0, 0, 1, 1], [], []>} : vector<8x32xf32>, vector<32x32xf32>, vector<8x32xf32> -> vector<8x32xf32>
    %c0_14 = arith.constant 0 : index
    %c1 = arith.constant 1 : index
    %c0_15 = arith.constant 0 : index
    %c0_16 = arith.constant 0 : index
    %23 = vector.load %arg6[%c0_14, %c1, %c0_15, %c0_16] : memref<2x3x32x32xf32, #tpu.memory_space<vmem>>, vector<1x1x32x32xf32>
    %24 = vector.shape_cast %23 : vector<1x1x32x32xf32> to vector<32x32xf32>
    %cst_17 = arith.constant dense<0.000000e+00> : vector<8x32xf32>
    %25 = tpu.matmul %18, %24, %cst_17 {dimension_numbers = #tpu.dot_dimension_numbers<[1], [0], [0], [1], [0, 0, 1, 1], [], []>} : vector<8x32xf32>, vector<32x32xf32>, vector<8x32xf32> -> vector<8x32xf32>
    %c0_18 = arith.constant 0 : index
    %c2 = arith.constant 2 : index
    %c0_19 = arith.constant 0 : index
    %c0_20 = arith.constant 0 : index
    %26 = vector.load %arg6[%c0_18, %c2, %c0_19, %c0_20] : memref<2x3x32x32xf32, #tpu.memory_space<vmem>>, vector<1x1x32x32xf32>
    %27 = vector.shape_cast %26 : vector<1x1x32x32xf32> to vector<32x32xf32>
    %cst_21 = arith.constant dense<0.000000e+00> : vector<8x32xf32>
    %28 = tpu.matmul %18, %27, %cst_21 {dimension_numbers = #tpu.dot_dimension_numbers<[1], [0], [0], [1], [0, 0, 1, 1], [], []>} : vector<8x32xf32>, vector<32x32xf32>, vector<8x32xf32> -> vector<8x32xf32>
    %29 = vector.broadcast %19 : f32 to vector<8x8xf32>
    %30 = arith.mulf %29, %3 : vector<8x8xf32>
    %cst_22 = arith.constant dense<0xFF800000> : vector<8xf32>
    %31 = vector.multi_reduction <maximumf>, %30, %cst_22 [1] : vector<8x8xf32> to vector<8xf32>
    %32 = vector.shape_cast %31 : vector<8xf32> to vector<8x1xf32>
    %33 = vector.broadcast %32 : vector<8x1xf32> to vector<8x8xf32>
    %34 = arith.subf %30, %33 : vector<8x8xf32>
    %cst_23 = arith.constant dense<0xFF800000> : vector<32xf32>
    %35 = vector.multi_reduction <maximumf>, %25, %cst_23 [0] : vector<8x32xf32> to vector<32xf32>
    %36 = vector.shape_cast %35 : vector<32xf32> to vector<1x32xf32>
    %37 = vector.broadcast %36 : vector<1x32xf32> to vector<8x32xf32>
    %38 = arith.subf %25, %37 : vector<8x32xf32>
    %39 = math.exp %34 : vector<8x8xf32>
    %40 = math.exp %38 : vector<8x32xf32>
    %41 = arith.mulf %40, %28 : vector<8x32xf32>
    %cst_24 = arith.constant dense<0.000000e+00> : vector<8x32xf32>
    %42 = tpu.matmul %39, %41, %cst_24 {dimension_numbers = #tpu.dot_dimension_numbers<[1], [0], [0], [1], [0, 0, 1, 1], [], []>} : vector<8x8xf32>, vector<8x32xf32>, vector<8x32xf32> -> vector<8x32xf32>
    %cst_25 = arith.constant dense<0.000000e+00> : vector<8x32xf32>
    %43 = tpu.matmul %39, %40, %cst_25 {dimension_numbers = #tpu.dot_dimension_numbers<[1], [0], [0], [1], [0, 0, 1, 1], [], []>} : vector<8x8xf32>, vector<8x32xf32>, vector<8x32xf32> -> vector<8x32xf32>
    %44 = arith.negf %22 : vector<8x32xf32>
    %45 = math.exp %44 : vector<8x32xf32>
    %cst_26 = arith.constant 1.000000e+00 : f32
    %46 = vector.broadcast %cst_26 : f32 to vector<8x32xf32>
    %47 = arith.addf %46, %45 : vector<8x32xf32>
    %48 = arith.divf %46, %47 : vector<8x32xf32>
    %49 = tpu.reciprocal %43 {approx = true} : vector<8x32xf32> -> vector<8x32xf32>
    %50 = arith.mulf %42, %49 : vector<8x32xf32>
    %51 = arith.mulf %48, %50 : vector<8x32xf32>
    %52 = arith.addf %18, %51 : vector<8x32xf32>
    %c0_27 = arith.constant 0 : index
    %c0_28 = arith.constant 0 : index
    %c0_29 = arith.constant 0 : index
    %53 = vector.load %arg7[%c0_27, %c0_28, %c0_29] : memref<2x1x32xf32, #tpu.memory_space<vmem>>, vector<1x1x32xf32>
    %54 = vector.shape_cast %53 : vector<1x1x32xf32> to vector<1x32xf32>
    %c0_30 = arith.constant 0 : index
    %c0_31 = arith.constant 0 : index
    %c0_32 = arith.constant 0 : index
    %55 = vector.load %arg8[%c0_30, %c0_31, %c0_32] : memref<2x1x32xf32, #tpu.memory_space<vmem>>, vector<1x1x32xf32>
    %56 = vector.shape_cast %55 : vector<1x1x32xf32> to vector<1x32xf32>
    %cst_33 = arith.constant dense<0.000000e+00> : vector<32xf32>
    %57 = vector.multi_reduction <add>, %52, %cst_33 [0] : vector<8x32xf32> to vector<32xf32>
    %58 = vector.shape_cast %57 : vector<32xf32> to vector<1x32xf32>
    %cst_34 = arith.constant 1.250000e-01 : f32
    %59 = vector.broadcast %cst_34 : f32 to vector<1x32xf32>
    %60 = arith.mulf %58, %59 : vector<1x32xf32>
    %61 = arith.mulf %52, %52 : vector<8x32xf32>
    %cst_35 = arith.constant dense<0.000000e+00> : vector<32xf32>
    %62 = vector.multi_reduction <add>, %61, %cst_35 [0] : vector<8x32xf32> to vector<32xf32>
    %63 = vector.shape_cast %62 : vector<32xf32> to vector<1x32xf32>
    %cst_36 = arith.constant 1.250000e-01 : f32
    %64 = vector.broadcast %cst_36 : f32 to vector<1x32xf32>
    %65 = arith.mulf %63, %64 : vector<1x32xf32>
    %66 = arith.mulf %60, %60 : vector<1x32xf32>
    %67 = arith.subf %65, %66 : vector<1x32xf32>
    %68 = vector.broadcast %60 : vector<1x32xf32> to vector<8x32xf32>
    %69 = arith.subf %52, %68 : vector<8x32xf32>
    %cst_37 = arith.constant 9.99999974E-6 : f32
    %70 = vector.broadcast %cst_37 : f32 to vector<1x32xf32>
    %71 = arith.addf %67, %70 : vector<1x32xf32>
    %72 = math.rsqrt %71 : vector<1x32xf32>
    %73 = vector.broadcast %72 : vector<1x32xf32> to vector<8x32xf32>
    %74 = arith.mulf %69, %73 : vector<8x32xf32>
    %75 = vector.broadcast %54 : vector<1x32xf32> to vector<8x32xf32>
    %76 = arith.mulf %74, %75 : vector<8x32xf32>
    %77 = vector.broadcast %56 : vector<1x32xf32> to vector<8x32xf32>
    %78 = arith.addf %76, %77 : vector<8x32xf32>
    %c0_38 = arith.constant 0 : index
    %c0_39 = arith.constant 0 : index
    %c0_40 = arith.constant 0 : index
    %79 = vector.load %arg9[%c0_38, %c0_39, %c0_40] : memref<2x32x64xf32, #tpu.memory_space<vmem>>, vector<1x32x64xf32>
    %80 = vector.shape_cast %79 : vector<1x32x64xf32> to vector<32x64xf32>
    %cst_41 = arith.constant dense<0.000000e+00> : vector<8x64xf32>
    %81 = tpu.matmul %78, %80, %cst_41 {dimension_numbers = #tpu.dot_dimension_numbers<[1], [0], [0], [1], [0, 0, 1, 1], [], []>} : vector<8x32xf32>, vector<32x64xf32>, vector<8x64xf32> -> vector<8x64xf32>
    %c0_42 = arith.constant 0 : index
    %c0_43 = arith.constant 0 : index
    %c0_44 = arith.constant 0 : index
    %82 = vector.load %arg10[%c0_42, %c0_43, %c0_44] : memref<2x1x64xf32, #tpu.memory_space<vmem>>, vector<1x1x64xf32>
    %83 = vector.shape_cast %82 : vector<1x1x64xf32> to vector<1x64xf32>
    %84 = vector.broadcast %83 : vector<1x64xf32> to vector<8x64xf32>
    %85 = arith.addf %81, %84 : vector<8x64xf32>
    %cst_45 = arith.constant 0.000000e+00 : f32
    %86 = vector.broadcast %cst_45 : f32 to vector<8x64xf32>
    %87 = arith.maximumf %85, %86 : vector<8x64xf32>
    %c0_46 = arith.constant 0 : index
    %c0_47 = arith.constant 0 : index
    %c0_48 = arith.constant 0 : index
    %88 = vector.load %arg11[%c0_46, %c0_47, %c0_48] : memref<2x64x32xf32, #tpu.memory_space<vmem>>, vector<1x64x32xf32>
    %89 = vector.shape_cast %88 : vector<1x64x32xf32> to vector<64x32xf32>
    %cst_49 = arith.constant dense<0.000000e+00> : vector<8x32xf32>
    %90 = tpu.matmul %87, %89, %cst_49 {dimension_numbers = #tpu.dot_dimension_numbers<[1], [0], [0], [1], [0, 0, 1, 1], [], []>} : vector<8x64xf32>, vector<64x32xf32>, vector<8x32xf32> -> vector<8x32xf32>
    %c0_50 = arith.constant 0 : index
    %c0_51 = arith.constant 0 : index
    %c0_52 = arith.constant 0 : index
    %91 = vector.load %arg12[%c0_50, %c0_51, %c0_52] : memref<2x1x32xf32, #tpu.memory_space<vmem>>, vector<1x1x32xf32>
    %92 = vector.shape_cast %91 : vector<1x1x32xf32> to vector<1x32xf32>
    %93 = vector.broadcast %92 : vector<1x32xf32> to vector<8x32xf32>
    %94 = arith.addf %90, %93 : vector<8x32xf32>
    %95 = arith.addf %78, %94 : vector<8x32xf32>
    %c0_53 = arith.constant 0 : index
    %c0_54 = arith.constant 0 : index
    %c0_55 = arith.constant 0 : index
    %96 = vector.load %arg13[%c0_53, %c0_54, %c0_55] : memref<2x1x32xf32, #tpu.memory_space<vmem>>, vector<1x1x32xf32>
    %97 = vector.shape_cast %96 : vector<1x1x32xf32> to vector<1x32xf32>
    %c0_56 = arith.constant 0 : index
    %c0_57 = arith.constant 0 : index
    %c0_58 = arith.constant 0 : index
    %98 = vector.load %arg14[%c0_56, %c0_57, %c0_58] : memref<2x1x32xf32, #tpu.memory_space<vmem>>, vector<1x1x32xf32>
    %99 = vector.shape_cast %98 : vector<1x1x32xf32> to vector<1x32xf32>
    %cst_59 = arith.constant dense<0.000000e+00> : vector<32xf32>
    %100 = vector.multi_reduction <add>, %95, %cst_59 [0] : vector<8x32xf32> to vector<32xf32>
    %101 = vector.shape_cast %100 : vector<32xf32> to vector<1x32xf32>
    %cst_60 = arith.constant 1.250000e-01 : f32
    %102 = vector.broadcast %cst_60 : f32 to vector<1x32xf32>
    %103 = arith.mulf %101, %102 : vector<1x32xf32>
    %104 = arith.mulf %95, %95 : vector<8x32xf32>
    %cst_61 = arith.constant dense<0.000000e+00> : vector<32xf32>
    %105 = vector.multi_reduction <add>, %104, %cst_61 [0] : vector<8x32xf32> to vector<32xf32>
    %106 = vector.shape_cast %105 : vector<32xf32> to vector<1x32xf32>
    %cst_62 = arith.constant 1.250000e-01 : f32
    %107 = vector.broadcast %cst_62 : f32 to vector<1x32xf32>
    %108 = arith.mulf %106, %107 : vector<1x32xf32>
    %109 = arith.mulf %103, %103 : vector<1x32xf32>
    %110 = arith.subf %108, %109 : vector<1x32xf32>
    %111 = vector.broadcast %103 : vector<1x32xf32> to vector<8x32xf32>
    %112 = arith.subf %95, %111 : vector<8x32xf32>
    %cst_63 = arith.constant 9.99999974E-6 : f32
    %113 = vector.broadcast %cst_63 : f32 to vector<1x32xf32>
    %114 = arith.addf %110, %113 : vector<1x32xf32>
    %115 = math.rsqrt %114 : vector<1x32xf32>
    %116 = vector.broadcast %115 : vector<1x32xf32> to vector<8x32xf32>
    %117 = arith.mulf %112, %116 : vector<8x32xf32>
    %118 = vector.broadcast %97 : vector<1x32xf32> to vector<8x32xf32>
    %119 = arith.mulf %117, %118 : vector<8x32xf32>
    %120 = vector.broadcast %99 : vector<1x32xf32> to vector<8x32xf32>
    %121 = arith.addf %119, %120 : vector<8x32xf32>
    %c1_64 = arith.constant 1 : index
    %122 = memref.load %arg1[%c1_64] : memref<2xf32, #tpu.memory_space<smem>>
    %c1_65 = arith.constant 1 : index
    %c0_66 = arith.constant 0 : index
    %c0_67 = arith.constant 0 : index
    %c0_68 = arith.constant 0 : index
    %123 = vector.load %arg6[%c1_65, %c0_66, %c0_67, %c0_68] : memref<2x3x32x32xf32, #tpu.memory_space<vmem>>, vector<1x1x32x32xf32>
    %124 = vector.shape_cast %123 : vector<1x1x32x32xf32> to vector<32x32xf32>
    %cst_69 = arith.constant dense<0.000000e+00> : vector<8x32xf32>
    %125 = tpu.matmul %121, %124, %cst_69 {dimension_numbers = #tpu.dot_dimension_numbers<[1], [0], [0], [1], [0, 0, 1, 1], [], []>} : vector<8x32xf32>, vector<32x32xf32>, vector<8x32xf32> -> vector<8x32xf32>
    %c1_70 = arith.constant 1 : index
    %c1_71 = arith.constant 1 : index
    %c0_72 = arith.constant 0 : index
    %c0_73 = arith.constant 0 : index
    %126 = vector.load %arg6[%c1_70, %c1_71, %c0_72, %c0_73] : memref<2x3x32x32xf32, #tpu.memory_space<vmem>>, vector<1x1x32x32xf32>
    %127 = vector.shape_cast %126 : vector<1x1x32x32xf32> to vector<32x32xf32>
    %cst_74 = arith.constant dense<0.000000e+00> : vector<8x32xf32>
    %128 = tpu.matmul %121, %127, %cst_74 {dimension_numbers = #tpu.dot_dimension_numbers<[1], [0], [0], [1], [0, 0, 1, 1], [], []>} : vector<8x32xf32>, vector<32x32xf32>, vector<8x32xf32> -> vector<8x32xf32>
    %c1_75 = arith.constant 1 : index
    %c2_76 = arith.constant 2 : index
    %c0_77 = arith.constant 0 : index
    %c0_78 = arith.constant 0 : index
    %129 = vector.load %arg6[%c1_75, %c2_76, %c0_77, %c0_78] : memref<2x3x32x32xf32, #tpu.memory_space<vmem>>, vector<1x1x32x32xf32>
    %130 = vector.shape_cast %129 : vector<1x1x32x32xf32> to vector<32x32xf32>
    %cst_79 = arith.constant dense<0.000000e+00> : vector<8x32xf32>
    %131 = tpu.matmul %121, %130, %cst_79 {dimension_numbers = #tpu.dot_dimension_numbers<[1], [0], [0], [1], [0, 0, 1, 1], [], []>} : vector<8x32xf32>, vector<32x32xf32>, vector<8x32xf32> -> vector<8x32xf32>
    %132 = vector.broadcast %122 : f32 to vector<8x8xf32>
    %133 = arith.mulf %132, %3 : vector<8x8xf32>
    %cst_80 = arith.constant dense<0xFF800000> : vector<8xf32>
    %134 = vector.multi_reduction <maximumf>, %133, %cst_80 [1] : vector<8x8xf32> to vector<8xf32>
    %135 = vector.shape_cast %134 : vector<8xf32> to vector<8x1xf32>
    %136 = vector.broadcast %135 : vector<8x1xf32> to vector<8x8xf32>
    %137 = arith.subf %133, %136 : vector<8x8xf32>
    %cst_81 = arith.constant dense<0xFF800000> : vector<32xf32>
    %138 = vector.multi_reduction <maximumf>, %128, %cst_81 [0] : vector<8x32xf32> to vector<32xf32>
    %139 = vector.shape_cast %138 : vector<32xf32> to vector<1x32xf32>
    %140 = vector.broadcast %139 : vector<1x32xf32> to vector<8x32xf32>
    %141 = arith.subf %128, %140 : vector<8x32xf32>
    %142 = math.exp %137 : vector<8x8xf32>
    %143 = math.exp %141 : vector<8x32xf32>
    %144 = arith.mulf %143, %131 : vector<8x32xf32>
    %cst_82 = arith.constant dense<0.000000e+00> : vector<8x32xf32>
    %145 = tpu.matmul %142, %144, %cst_82 {dimension_numbers = #tpu.dot_dimension_numbers<[1], [0], [0], [1], [0, 0, 1, 1], [], []>} : vector<8x8xf32>, vector<8x32xf32>, vector<8x32xf32> -> vector<8x32xf32>
    %cst_83 = arith.constant dense<0.000000e+00> : vector<8x32xf32>
    %146 = tpu.matmul %142, %143, %cst_83 {dimension_numbers = #tpu.dot_dimension_numbers<[1], [0], [0], [1], [0, 0, 1, 1], [], []>} : vector<8x8xf32>, vector<8x32xf32>, vector<8x32xf32> -> vector<8x32xf32>
    %147 = arith.negf %125 : vector<8x32xf32>
    %148 = math.exp %147 : vector<8x32xf32>
    %cst_84 = arith.constant 1.000000e+00 : f32
    %149 = vector.broadcast %cst_84 : f32 to vector<8x32xf32>
    %150 = arith.addf %149, %148 : vector<8x32xf32>
    %151 = arith.divf %149, %150 : vector<8x32xf32>
    %152 = tpu.reciprocal %146 {approx = true} : vector<8x32xf32> -> vector<8x32xf32>
    %153 = arith.mulf %145, %152 : vector<8x32xf32>
    %154 = arith.mulf %151, %153 : vector<8x32xf32>
    %155 = arith.addf %121, %154 : vector<8x32xf32>
    %c1_85 = arith.constant 1 : index
    %c0_86 = arith.constant 0 : index
    %c0_87 = arith.constant 0 : index
    %156 = vector.load %arg7[%c1_85, %c0_86, %c0_87] : memref<2x1x32xf32, #tpu.memory_space<vmem>>, vector<1x1x32xf32>
    %157 = vector.shape_cast %156 : vector<1x1x32xf32> to vector<1x32xf32>
    %c1_88 = arith.constant 1 : index
    %c0_89 = arith.constant 0 : index
    %c0_90 = arith.constant 0 : index
    %158 = vector.load %arg8[%c1_88, %c0_89, %c0_90] : memref<2x1x32xf32, #tpu.memory_space<vmem>>, vector<1x1x32xf32>
    %159 = vector.shape_cast %158 : vector<1x1x32xf32> to vector<1x32xf32>
    %cst_91 = arith.constant dense<0.000000e+00> : vector<32xf32>
    %160 = vector.multi_reduction <add>, %155, %cst_91 [0] : vector<8x32xf32> to vector<32xf32>
    %161 = vector.shape_cast %160 : vector<32xf32> to vector<1x32xf32>
    %cst_92 = arith.constant 1.250000e-01 : f32
    %162 = vector.broadcast %cst_92 : f32 to vector<1x32xf32>
    %163 = arith.mulf %161, %162 : vector<1x32xf32>
    %164 = arith.mulf %155, %155 : vector<8x32xf32>
    %cst_93 = arith.constant dense<0.000000e+00> : vector<32xf32>
    %165 = vector.multi_reduction <add>, %164, %cst_93 [0] : vector<8x32xf32> to vector<32xf32>
    %166 = vector.shape_cast %165 : vector<32xf32> to vector<1x32xf32>
    %cst_94 = arith.constant 1.250000e-01 : f32
    %167 = vector.broadcast %cst_94 : f32 to vector<1x32xf32>
    %168 = arith.mulf %166, %167 : vector<1x32xf32>
    %169 = arith.mulf %163, %163 : vector<1x32xf32>
    %170 = arith.subf %168, %169 : vector<1x32xf32>
    %171 = vector.broadcast %163 : vector<1x32xf32> to vector<8x32xf32>
    %172 = arith.subf %155, %171 : vector<8x32xf32>
    %cst_95 = arith.constant 9.99999974E-6 : f32
    %173 = vector.broadcast %cst_95 : f32 to vector<1x32xf32>
    %174 = arith.addf %170, %173 : vector<1x32xf32>
    %175 = math.rsqrt %174 : vector<1x32xf32>
    %176 = vector.broadcast %175 : vector<1x32xf32> to vector<8x32xf32>
    %177 = arith.mulf %172, %176 : vector<8x32xf32>
    %178 = vector.broadcast %157 : vector<1x32xf32> to vector<8x32xf32>
    %179 = arith.mulf %177, %178 : vector<8x32xf32>
    %180 = vector.broadcast %159 : vector<1x32xf32> to vector<8x32xf32>
    %181 = arith.addf %179, %180 : vector<8x32xf32>
    %c1_96 = arith.constant 1 : index
    %c0_97 = arith.constant 0 : index
    %c0_98 = arith.constant 0 : index
    %182 = vector.load %arg9[%c1_96, %c0_97, %c0_98] : memref<2x32x64xf32, #tpu.memory_space<vmem>>, vector<1x32x64xf32>
    %183 = vector.shape_cast %182 : vector<1x32x64xf32> to vector<32x64xf32>
    %cst_99 = arith.constant dense<0.000000e+00> : vector<8x64xf32>
    %184 = tpu.matmul %181, %183, %cst_99 {dimension_numbers = #tpu.dot_dimension_numbers<[1], [0], [0], [1], [0, 0, 1, 1], [], []>} : vector<8x32xf32>, vector<32x64xf32>, vector<8x64xf32> -> vector<8x64xf32>
    %c1_100 = arith.constant 1 : index
    %c0_101 = arith.constant 0 : index
    %c0_102 = arith.constant 0 : index
    %185 = vector.load %arg10[%c1_100, %c0_101, %c0_102] : memref<2x1x64xf32, #tpu.memory_space<vmem>>, vector<1x1x64xf32>
    %186 = vector.shape_cast %185 : vector<1x1x64xf32> to vector<1x64xf32>
    %187 = vector.broadcast %186 : vector<1x64xf32> to vector<8x64xf32>
    %188 = arith.addf %184, %187 : vector<8x64xf32>
    %cst_103 = arith.constant 0.000000e+00 : f32
    %189 = vector.broadcast %cst_103 : f32 to vector<8x64xf32>
    %190 = arith.maximumf %188, %189 : vector<8x64xf32>
    %c1_104 = arith.constant 1 : index
    %c0_105 = arith.constant 0 : index
    %c0_106 = arith.constant 0 : index
    %191 = vector.load %arg11[%c1_104, %c0_105, %c0_106] : memref<2x64x32xf32, #tpu.memory_space<vmem>>, vector<1x64x32xf32>
    %192 = vector.shape_cast %191 : vector<1x64x32xf32> to vector<64x32xf32>
    %cst_107 = arith.constant dense<0.000000e+00> : vector<8x32xf32>
    %193 = tpu.matmul %190, %192, %cst_107 {dimension_numbers = #tpu.dot_dimension_numbers<[1], [0], [0], [1], [0, 0, 1, 1], [], []>} : vector<8x64xf32>, vector<64x32xf32>, vector<8x32xf32> -> vector<8x32xf32>
    %c1_108 = arith.constant 1 : index
    %c0_109 = arith.constant 0 : index
    %c0_110 = arith.constant 0 : index
    %194 = vector.load %arg12[%c1_108, %c0_109, %c0_110] : memref<2x1x32xf32, #tpu.memory_space<vmem>>, vector<1x1x32xf32>
    %195 = vector.shape_cast %194 : vector<1x1x32xf32> to vector<1x32xf32>
    %196 = vector.broadcast %195 : vector<1x32xf32> to vector<8x32xf32>
    %197 = arith.addf %193, %196 : vector<8x32xf32>
    %198 = arith.addf %181, %197 : vector<8x32xf32>
    %c1_111 = arith.constant 1 : index
    %c0_112 = arith.constant 0 : index
    %c0_113 = arith.constant 0 : index
    %199 = vector.load %arg13[%c1_111, %c0_112, %c0_113] : memref<2x1x32xf32, #tpu.memory_space<vmem>>, vector<1x1x32xf32>
    %200 = vector.shape_cast %199 : vector<1x1x32xf32> to vector<1x32xf32>
    %c1_114 = arith.constant 1 : index
    %c0_115 = arith.constant 0 : index
    %c0_116 = arith.constant 0 : index
    %201 = vector.load %arg14[%c1_114, %c0_115, %c0_116] : memref<2x1x32xf32, #tpu.memory_space<vmem>>, vector<1x1x32xf32>
    %202 = vector.shape_cast %201 : vector<1x1x32xf32> to vector<1x32xf32>
    %cst_117 = arith.constant dense<0.000000e+00> : vector<32xf32>
    %203 = vector.multi_reduction <add>, %198, %cst_117 [0] : vector<8x32xf32> to vector<32xf32>
    %204 = vector.shape_cast %203 : vector<32xf32> to vector<1x32xf32>
    %cst_118 = arith.constant 1.250000e-01 : f32
    %205 = vector.broadcast %cst_118 : f32 to vector<1x32xf32>
    %206 = arith.mulf %204, %205 : vector<1x32xf32>
    %207 = arith.mulf %198, %198 : vector<8x32xf32>
    %cst_119 = arith.constant dense<0.000000e+00> : vector<32xf32>
    %208 = vector.multi_reduction <add>, %207, %cst_119 [0] : vector<8x32xf32> to vector<32xf32>
    %209 = vector.shape_cast %208 : vector<32xf32> to vector<1x32xf32>
    %cst_120 = arith.constant 1.250000e-01 : f32
    %210 = vector.broadcast %cst_120 : f32 to vector<1x32xf32>
    %211 = arith.mulf %209, %210 : vector<1x32xf32>
    %212 = arith.mulf %206, %206 : vector<1x32xf32>
    %213 = arith.subf %211, %212 : vector<1x32xf32>
    %214 = vector.broadcast %206 : vector<1x32xf32> to vector<8x32xf32>
    %215 = arith.subf %198, %214 : vector<8x32xf32>
    %cst_121 = arith.constant 9.99999974E-6 : f32
    %216 = vector.broadcast %cst_121 : f32 to vector<1x32xf32>
    %217 = arith.addf %213, %216 : vector<1x32xf32>
    %218 = math.rsqrt %217 : vector<1x32xf32>
    %219 = vector.broadcast %218 : vector<1x32xf32> to vector<8x32xf32>
    %220 = arith.mulf %215, %219 : vector<8x32xf32>
    %221 = vector.broadcast %200 : vector<1x32xf32> to vector<8x32xf32>
    %222 = arith.mulf %220, %221 : vector<8x32xf32>
    %223 = vector.broadcast %202 : vector<1x32xf32> to vector<8x32xf32>
    %224 = arith.addf %222, %223 : vector<8x32xf32>
    %c0_122 = arith.constant 0 : index
    %c0_123 = arith.constant 0 : index
    %c0_124 = arith.constant 0 : index
    %225 = vector.load %arg15[%c0_122, %c0_123, %c0_124] : memref<1x8x32xf32, #tpu.memory_space<vmem>>, vector<1x8x32xf32>
    %226 = vector.shape_cast %225 : vector<1x8x32xf32> to vector<8x32xf32>
    %227 = vector.shape_cast %224 : vector<8x32xf32> to vector<1x8x32xf32>
    tpu.vector_store %arg15[%c0_122, %c0_123, %c0_124], %227 {strides = array<i32>} : memref<1x8x32xf32, #tpu.memory_space<vmem>>, vector<1x8x32xf32>,
    return
  }
  func.func @transform_0(%arg0: i32) -> i32 {
    %c0_i32 = arith.constant 0 : i32
    %c0_i32_0 = arith.constant 0 : i32
    return %c0_i32 : i32
  }
  func.func @transform_1(%arg0: i32) -> (i32, i32, i32) {
    %c0_i32 = arith.constant 0 : i32
    %c0_i32_0 = arith.constant 0 : i32
    %c0_i32_1 = arith.constant 0 : i32
    return %arg0, %c0_i32, %c0_i32_0 : i32, i32, i32
  }
  func.func @transform_2(%arg0: i32) -> (i32, i32, i32) {
    %c0_i32 = arith.constant 0 : i32
    %c0_i32_0 = arith.constant 0 : i32
    %c0_i32_1 = arith.constant 0 : i32
    return %arg0, %c0_i32, %c0_i32_0 : i32, i32, i32
  }
  func.func @transform_3(%arg0: i32) -> (i32, i32) {
    %c0_i32 = arith.constant 0 : i32
    %c0_i32_0 = arith.constant 0 : i32
    %c0_i32_1 = arith.constant 0 : i32
    return %c0_i32, %c0_i32_0 : i32, i32
  }
  func.func @transform_4(%arg0: i32) -> (i32, i32) {
    %c0_i32 = arith.constant 0 : i32
    %c0_i32_0 = arith.constant 0 : i32
    %c0_i32_1 = arith.constant 0 : i32
    return %c0_i32, %c0_i32_0 : i32, i32
  }
  func.func @transform_5(%arg0: i32) -> (i32, i32, i32, i32) {
    %c0_i32 = arith.constant 0 : i32
    %c0_i32_0 = arith.constant 0 : i32
    %c0_i32_1 = arith.constant 0 : i32
    %c0_i32_2 = arith.constant 0 : i32
    %c0_i32_3 = arith.constant 0 : i32
    return %c0_i32, %c0_i32_0, %c0_i32_1, %c0_i32_2 : i32, i32, i32, i32
  }
  func.func @transform_6(%arg0: i32) -> (i32, i32, i32) {
    %c0_i32 = arith.constant 0 : i32
    %c0_i32_0 = arith.constant 0 : i32
    %c0_i32_1 = arith.constant 0 : i32
    %c0_i32_2 = arith.constant 0 : i32
    return %c0_i32, %c0_i32_0, %c0_i32_1 : i32, i32, i32
  }
  func.func @transform_7(%arg0: i32) -> (i32, i32, i32) {
    %c0_i32 = arith.constant 0 : i32
    %c0_i32_0 = arith.constant 0 : i32
    %c0_i32_1 = arith.constant 0 : i32
    %c0_i32_2 = arith.constant 0 : i32
    return %c0_i32, %c0_i32_0, %c0_i32_1 : i32, i32, i32
  }
  func.func @transform_8(%arg0: i32) -> (i32, i32, i32) {
    %c0_i32 = arith.constant 0 : i32
    %c0_i32_0 = arith.constant 0 : i32
    %c0_i32_1 = arith.constant 0 : i32
    %c0_i32_2 = arith.constant 0 : i32
    return %c0_i32, %c0_i32_0, %c0_i32_1 : i32, i32, i32
  }
  func.func @transform_9(%arg0: i32) -> (i32, i32, i32) {
    %c0_i32 = arith.constant 0 : i32
    %c0_i32_0 = arith.constant 0 : i32
    %c0_i32_1 = arith.constant 0 : i32
    %c0_i32_2 = arith.constant 0 : i32
    return %c0_i32, %c0_i32_0, %c0_i32_1 : i32, i32, i32
  }
  func.func @transform_10(%arg0: i32) -> (i32, i32, i32) {
    %c0_i32 = arith.constant 0 : i32
    %c0_i32_0 = arith.constant 0 : i32
    %c0_i32_1 = arith.constant 0 : i32
    %c0_i32_2 = arith.constant 0 : i32
    return %c0_i32, %c0_i32_0, %c0_i32_1 : i32, i32, i32
  }
  func.func @transform_11(%arg0: i32) -> (i32, i32, i32) {
    %c0_i32 = arith.constant 0 : i32
    %c0_i32_0 = arith.constant 0 : i32
    %c0_i32_1 = arith.constant 0 : i32
    %c0_i32_2 = arith.constant 0 : i32
    return %c0_i32, %c0_i32_0, %c0_i32_1 : i32, i32, i32
  }
  func.func @transform_12(%arg0: i32) -> (i32, i32, i32) {
    %c0_i32 = arith.constant 0 : i32
    %c0_i32_0 = arith.constant 0 : i32
    %c0_i32_1 = arith.constant 0 : i32
    %c0_i32_2 = arith.constant 0 : i32
    return %c0_i32, %c0_i32_0, %c0_i32_1 : i32, i32, i32
  }
  func.func @transform_13(%arg0: i32) -> (i32, i32, i32) {
    %c0_i32 = arith.constant 0 : i32
    %c0_i32_0 = arith.constant 0 : i32
    %c0_i32_1 = arith.constant 0 : i32
    %c0_i32_2 = arith.constant 0 : i32
    return %c0_i32, %c0_i32_0, %c0_i32_1 : i32, i32, i32
  }
  func.func @transform_14(%arg0: i32) -> (i32, i32, i32) {
    %c0_i32 = arith.constant 0 : i32
    %c0_i32_0 = arith.constant 0 : i32
    %c0_i32_1 = arith.constant 0 : i32
    return %arg0, %c0_i32, %c0_i32_0 : i32, i32, i32
  }
}

</mosaic_0001>

<llo_original>
// kernel: tpu_custom_call.1
$region0: #{tpu_custom_call.1}
  #allocation0 [shape = 'u32[]', space=smem, size = 0x4, offset = 0x4, fixed_abs, tag = 'smem constant byte address 0x4 - core index']
  #allocation1 [shape = 'u32[144,128]{1,0:T(1,128)}', space=vmem, size = 0x12000, scoped, tag = 'internal scratch']
  %s0 = inlined_call_operand.vmem [shape: f32[2], index: 0, kind: input, shape index: {}]
  %s1 = inlined_call_operand.vmem [shape: f32[2,8,2], index: 1, kind: input, shape index: {}]
  %s2 = inlined_call_operand.vmem [shape: f32[2,8,8], index: 2, kind: input, shape index: {}]
  %s3 = inlined_call_operand.vmem [shape: f32[2,32], index: 3, kind: input, shape index: {}]
  %s4 = inlined_call_operand.vmem [shape: f32[1,32], index: 4, kind: input, shape index: {}]
  %s5 = inlined_call_operand.vmem [shape: f32[2,3,32,32], index: 5, kind: input, shape index: {}]
  %s6 = inlined_call_operand.vmem [shape: f32[2,1,32], index: 6, kind: input, shape index: {}]
  %s7 = inlined_call_operand.vmem [shape: f32[2,1,32], index: 7, kind: input, shape index: {}]
  %s8 = inlined_call_operand.hbm [shape: f32[2,32,64], index: 8, kind: input, shape index: {}]
  %s9 = inlined_call_operand.vmem [shape: f32[2,1,64], index: 9, kind: input, shape index: {}]
  %s10 = inlined_call_operand.vmem [shape: f32[2,64,32], index: 10, kind: input, shape index: {}]
  %s11 = inlined_call_operand.vmem [shape: f32[2,1,32], index: 11, kind: input, shape index: {}]
  %s12 = inlined_call_operand.vmem [shape: f32[2,1,32], index: 12, kind: input, shape index: {}]
  %s13 = inlined_call_operand.vmem [shape: f32[2,1,32], index: 13, kind: input, shape index: {}]
  %s14 = inlined_call_operand.hbm [shape: f32[2,8,32], index: 14, kind: output, shape index: {}]
  %s15 = sld [smem:[#allocation0]]
  $region97: #{tpu_custom_call.1} parent=0
    _
  %s17 = ssub.s32 1, %s15
  %s18 = scalar_select 0, %s17, %s15
  $region1: #{tpu_custom_call.1} parent=0
    #allocation2 [shape = 'u8[512]{0}', space=smem, size = 0x200, scoped, tag = 'input window, operand 0, single buffered']
    #allocation3 [shape = 's32[2]{0}', space=sflag, size = 0x8, scoped, tag = 'scoped memory for tpu_custom_call.1']
    #allocation4 [shape = 's32[2]{0}', space=sflag, size = 0x8, scoped, tag = 'scoped memory for tpu_custom_call.1']
    #allocation5 [shape = 's32[2]{0}', space=sflag, size = 0x8, scoped, tag = 'scoped memory for tpu_custom_call.1']
    #allocation6 [shape = 'u8[32768]{0}', space=vmem, size = 0x8000, scoped, tag = 'input window, operand 8, single buffered']
    #allocation7 [shape = 'u8[8192]{0}', space=vmem, size = 0x2000, scoped, tag = 'output window, operand 0']
    %19 = vsyncpa [#allocation5], 0
    %20 = vsyncpa [#allocation3], 0
    %21 = vsyncpa [#allocation4], 0
    %s22 = scalar_lea.sflag [#allocation4], 1
    %23 = vsyncpa %s22, 0
    loop: start=0, step=1, limit=4
    $region2: #{tpu_custom_call.1} parent=1 // loop_pre_header
      _
    $region3: #{tpu_custom_call.1} parent=1 // loop_header
      %s25 = sphi 0, %s29
      %p26 = scmp.ge.s32.totalorder %s25, 4
      %s33 = sphi 0, %s33
      %s35 = sphi 0, %s33
      %s36 = sphi 0, %s35
      %s50 = sphi 0, %s36
      %s56 = sphi 0, %s58
      %s59 = sphi 0, %s56
      %s60 = sphi 0, %s59
      %s76 = sphi 0, %s60
      %s82 = sphi 0, %s84
      %s85 = sphi 0, %s82
      %s86 = sphi 0, %s85
      %s102 = sphi 0, %s86
      %s106 = sphi 0, %s106
      %s108 = sphi 0, %s106
      %s109 = sphi 0, %s108
      %s123 = sphi 0, %s109
      %s127 = sphi 0, %s127
      %s129 = sphi 0, %s127
      %s130 = sphi 0, %s129
      %s144 = sphi 0, %s130
      %s148 = sphi 0, %s148
      %s150 = sphi 0, %s148
      %s151 = sphi 0, %s150
      %s165 = sphi 0, %s151
      %s169 = sphi 0, %s169
      %s171 = sphi 0, %s169
      %s172 = sphi 0, %s171
      %s186 = sphi 0, %s172
      %s190 = sphi 0, %s190
      %s192 = sphi 0, %s190
      %s193 = sphi 0, %s192
      %s207 = sphi 0, %s193
      %s211 = sphi 0, %s211
      %s213 = sphi 0, %s211
      %s214 = sphi 0, %s213
      %s228 = sphi 0, %s214
      %s232 = sphi 0, %s232
      %s234 = sphi 0, %s232
      %s235 = sphi 0, %s234
      %s249 = sphi 0, %s235
      %s253 = sphi 0, %s253
      %s255 = sphi 0, %s253
      %s256 = sphi 0, %s255
      %s270 = sphi 0, %s256
      %s274 = sphi 0, %s274
      %s276 = sphi 0, %s274
      %s277 = sphi 0, %s276
      %s291 = sphi 0, %s277
      %s295 = sphi 0, %s295
      %s297 = sphi 0, %s295
      %s298 = sphi 0, %s297
      %s312 = sphi 0, %s298
      %s316 = sphi 0, %s316
      %s318 = sphi 0, %s316
      %s319 = sphi 0, %s318
      %s333 = sphi 0, %s319
      %s339 = sphi 0, %s341
      %s342 = sphi 0, %s339
      %s343 = sphi 0, %s342
      %s359 = sphi 0, %s343
    $region4: #{tpu_custom_call.1} parent=1 // loop_header_branch
      %28 = sbr.rel (%p26) target = $region8
    $region5: #{tpu_custom_call.1} parent=1 // loop_body
      %s30 = ssub.s32 %s25, 1
      %s31 = ssub.s32 %s25, 2
      %s32 = sadd.s32 %s25, 1
      %s34 = sadd.s32 %s33, 1
      %p37 = scmp.eq.s32.totalorder %s25, 1
      %p38 = scmp.ne.s32.totalorder %s33, %s35
      %p39 = scmp.eq.s32.totalorder %s25, 0
      %p40 = por %p38, %p39
      %p41 = scmp.ne.s32.totalorder %s33, %s35
      %p42 = scmp.eq.s32.totalorder %s30, 1
      %p43 = por %p41, %p42
      %p44 = scmp.ne.s32.totalorder %s35, %s36
      %p45 = scmp.eq.s32.totalorder %s30, 0
      %p46 = por %p44, %p45
      %p47 = scmp.ne.s32.totalorder %s35, %s36
      %p48 = scmp.eq.s32.totalorder %s31, 1
      %p49 = por %p47, %p48
      %p51 = scmp.ne.s32.totalorder %s36, %s50
      %p52 = scmp.eq.s32.totalorder %s31, 0
      %p53 = por %p51, %p52
      %s54 = ssub.s32 %s25, %s32
      %p55 = scmp.eq.s32.totalorder %s54, 0
      %s57 = sadd.s32 %s56, 1
      %s58 = scalar_select %p55, %s56, %s57
      %p61 = pneg %p55
      %p62 = scmp.eq.s32.totalorder %s25, 1
      %p63 = por %p61, %p62
      %p64 = scmp.ne.s32.totalorder %s56, %s59
      %p65 = scmp.eq.s32.totalorder %s25, 0
      %p66 = por %p64, %p65
      %p67 = scmp.ne.s32.totalorder %s56, %s59
      %p68 = scmp.eq.s32.totalorder %s30, 1
      %p69 = por %p67, %p68
      %p70 = scmp.ne.s32.totalorder %s59, %s60
      %p71 = scmp.eq.s32.totalorder %s30, 0
      %p72 = por %p70, %p71
      %p73 = scmp.ne.s32.totalorder %s59, %s60
      %p74 = scmp.eq.s32.totalorder %s31, 1
      %p75 = por %p73, %p74
      %p77 = scmp.ne.s32.totalorder %s60, %s76
      %p78 = scmp.eq.s32.totalorder %s31, 0
      %p79 = por %p77, %p78
      %s80 = ssub.s32 %s25, %s32
      %p81 = scmp.eq.s32.totalorder %s80, 0
      %s83 = sadd.s32 %s82, 1
      %s84 = scalar_select %p81, %s82, %s83
      %p87 = pneg %p81
      %p88 = scmp.eq.s32.totalorder %s25, 1
      %p89 = por %p87, %p88
      %p90 = scmp.ne.s32.totalorder %s82, %s85
      %p91 = scmp.eq.s32.totalorder %s25, 0
      %p92 = por %p90, %p91
      %p93 = scmp.ne.s32.totalorder %s82, %s85
      %p94 = scmp.eq.s32.totalorder %s30, 1
      %p95 = por %p93, %p94
      %p96 = scmp.ne.s32.totalorder %s85, %s86
      %p97 = scmp.eq.s32.totalorder %s30, 0
      %p98 = por %p96, %p97
      %p99 = scmp.ne.s32.totalorder %s85, %s86
      %p100 = scmp.eq.s32.totalorder %s31, 1
      %p101 = por %p99, %p100
      %p103 = scmp.ne.s32.totalorder %s86, %s102
      %p104 = scmp.eq.s32.totalorder %s31, 0
      %p105 = por %p103, %p104
      %s107 = sadd.s32 %s106, 1
      %p110 = scmp.eq.s32.totalorder %s25, 1
      %p111 = scmp.ne.s32.totalorder %s106, %s108
      %p112 = scmp.eq.s32.totalorder %s25, 0
      %p113 = por %p111, %p112
      %p114 = scmp.ne.s32.totalorder %s106, %s108
      %p115 = scmp.eq.s32.totalorder %s30, 1
      %p116 = por %p114, %p115
      %p117 = scmp.ne.s32.totalorder %s108, %s109
      %p118 = scmp.eq.s32.totalorder %s30, 0
      %p119 = por %p117, %p118
      %p120 = scmp.ne.s32.totalorder %s108, %s109
      %p121 = scmp.eq.s32.totalorder %s31, 1
      %p122 = por %p120, %p121
      %p124 = scmp.ne.s32.totalorder %s109, %s123
      %p125 = scmp.eq.s32.totalorder %s31, 0
      %p126 = por %p124, %p125
      %s128 = sadd.s32 %s127, 1
      %p131 = scmp.eq.s32.totalorder %s25, 1
      %p132 = scmp.ne.s32.totalorder %s127, %s129
      %p133 = scmp.eq.s32.totalorder %s25, 0
      %p134 = por %p132, %p133
      %p135 = scmp.ne.s32.totalorder %s127, %s129
      %p136 = scmp.eq.s32.totalorder %s30, 1
      %p137 = por %p135, %p136
      %p138 = scmp.ne.s32.totalorder %s129, %s130
      %p139 = scmp.eq.s32.totalorder %s30, 0
      %p140 = por %p138, %p139
      %p141 = scmp.ne.s32.totalorder %s129, %s130
      %p142 = scmp.eq.s32.totalorder %s31, 1
      %p143 = por %p141, %p142
      %p145 = scmp.ne.s32.totalorder %s130, %s144
      %p146 = scmp.eq.s32.totalorder %s31, 0
      %p147 = por %p145, %p146
      %s149 = sadd.s32 %s148, 1
      %p152 = scmp.eq.s32.totalorder %s25, 1
      %p153 = scmp.ne.s32.totalorder %s148, %s150
      %p154 = scmp.eq.s32.totalorder %s25, 0
      %p155 = por %p153, %p154
      %p156 = scmp.ne.s32.totalorder %s148, %s150
      %p157 = scmp.eq.s32.totalorder %s30, 1
      %p158 = por %p156, %p157
      %p159 = scmp.ne.s32.totalorder %s150, %s151
      %p160 = scmp.eq.s32.totalorder %s30, 0
      %p161 = por %p159, %p160
      %p162 = scmp.ne.s32.totalorder %s150, %s151
      %p163 = scmp.eq.s32.totalorder %s31, 1
      %p164 = por %p162, %p163
      %p166 = scmp.ne.s32.totalorder %s151, %s165
      %p167 = scmp.eq.s32.totalorder %s31, 0
      %p168 = por %p166, %p167
      %s170 = sadd.s32 %s169, 1
      %p173 = scmp.eq.s32.totalorder %s25, 1
      %p174 = scmp.ne.s32.totalorder %s169, %s171
      %p175 = scmp.eq.s32.totalorder %s25, 0
      %p176 = por %p174, %p175
      %p177 = scmp.ne.s32.totalorder %s169, %s171
      %p178 = scmp.eq.s32.totalorder %s30, 1
      %p179 = por %p177, %p178
      %p180 = scmp.ne.s32.totalorder %s171, %s172
      %p181 = scmp.eq.s32.totalorder %s30, 0
      %p182 = por %p180, %p181
      %p183 = scmp.ne.s32.totalorder %s171, %s172
      %p184 = scmp.eq.s32.totalorder %s31, 1
      %p185 = por %p183, %p184
      %p187 = scmp.ne.s32.totalorder %s172, %s186
      %p188 = scmp.eq.s32.totalorder %s31, 0
      %p189 = por %p187, %p188
      %s191 = sadd.s32 %s190, 1
      %p194 = scmp.eq.s32.totalorder %s25, 1
      %p195 = scmp.ne.s32.totalorder %s190, %s192
      %p196 = scmp.eq.s32.totalorder %s25, 0
      %p197 = por %p195, %p196
      %p198 = scmp.ne.s32.totalorder %s190, %s192
      %p199 = scmp.eq.s32.totalorder %s30, 1
      %p200 = por %p198, %p199
      %p201 = scmp.ne.s32.totalorder %s192, %s193
      %p202 = scmp.eq.s32.totalorder %s30, 0
      %p203 = por %p201, %p202
      %p204 = scmp.ne.s32.totalorder %s192, %s193
      %p205 = scmp.eq.s32.totalorder %s31, 1
      %p206 = por %p204, %p205
      %p208 = scmp.ne.s32.totalorder %s193, %s207
      %p209 = scmp.eq.s32.totalorder %s31, 0
      %p210 = por %p208, %p209
      %s212 = sadd.s32 %s211, 1
      %p215 = scmp.eq.s32.totalorder %s25, 1
      %p216 = scmp.ne.s32.totalorder %s211, %s213
      %p217 = scmp.eq.s32.totalorder %s25, 0
      %p218 = por %p216, %p217
      %p219 = scmp.ne.s32.totalorder %s211, %s213
      %p220 = scmp.eq.s32.totalorder %s30, 1
      %p221 = por %p219, %p220
      %p222 = scmp.ne.s32.totalorder %s213, %s214
      %p223 = scmp.eq.s32.totalorder %s30, 0
      %p224 = por %p222, %p223
      %p225 = scmp.ne.s32.totalorder %s213, %s214
      %p226 = scmp.eq.s32.totalorder %s31, 1
      %p227 = por %p225, %p226
      %p229 = scmp.ne.s32.totalorder %s214, %s228
      %p230 = scmp.eq.s32.totalorder %s31, 0
      %p231 = por %p229, %p230
      %s233 = sadd.s32 %s232, 1
      %p236 = scmp.eq.s32.totalorder %s25, 1
      %p237 = scmp.ne.s32.totalorder %s232, %s234
      %p238 = scmp.eq.s32.totalorder %s25, 0
      %p239 = por %p237, %p238
      %p240 = scmp.ne.s32.totalorder %s232, %s234
      %p241 = scmp.eq.s32.totalorder %s30, 1
      %p242 = por %p240, %p241
      %p243 = scmp.ne.s32.totalorder %s234, %s235
      %p244 = scmp.eq.s32.totalorder %s30, 0
      %p245 = por %p243, %p244
      %p246 = scmp.ne.s32.totalorder %s234, %s235
      %p247 = scmp.eq.s32.totalorder %s31, 1
      %p248 = por %p246, %p247
      %p250 = scmp.ne.s32.totalorder %s235, %s249
      %p251 = scmp.eq.s32.totalorder %s31, 0
      %p252 = por %p250, %p251
      %s254 = sadd.s32 %s253, 1
      %p257 = scmp.eq.s32.totalorder %s25, 1
      %p258 = scmp.ne.s32.totalorder %s253, %s255
      %p259 = scmp.eq.s32.totalorder %s25, 0
      %p260 = por %p258, %p259
      %p261 = scmp.ne.s32.totalorder %s253, %s255
      %p262 = scmp.eq.s32.totalorder %s30, 1
      %p263 = por %p261, %p262
      %p264 = scmp.ne.s32.totalorder %s255, %s256
      %p265 = scmp.eq.s32.totalorder %s30, 0
      %p266 = por %p264, %p265
      %p267 = scmp.ne.s32.totalorder %s255, %s256
      %p268 = scmp.eq.s32.totalorder %s31, 1
      %p269 = por %p267, %p268
      %p271 = scmp.ne.s32.totalorder %s256, %s270
      %p272 = scmp.eq.s32.totalorder %s31, 0
      %p273 = por %p271, %p272
      %s275 = sadd.s32 %s274, 1
      %p278 = scmp.eq.s32.totalorder %s25, 1
      %p279 = scmp.ne.s32.totalorder %s274, %s276
      %p280 = scmp.eq.s32.totalorder %s25, 0
      %p281 = por %p279, %p280
      %p282 = scmp.ne.s32.totalorder %s274, %s276
      %p283 = scmp.eq.s32.totalorder %s30, 1
      %p284 = por %p282, %p283
      %p285 = scmp.ne.s32.totalorder %s276, %s277
      %p286 = scmp.eq.s32.totalorder %s30, 0
      %p287 = por %p285, %p286
      %p288 = scmp.ne.s32.totalorder %s276, %s277
      %p289 = scmp.eq.s32.totalorder %s31, 1
      %p290 = por %p288, %p289
      %p292 = scmp.ne.s32.totalorder %s277, %s291
      %p293 = scmp.eq.s32.totalorder %s31, 0
      %p294 = por %p292, %p293
      %s296 = sadd.s32 %s295, 1
      %p299 = scmp.eq.s32.totalorder %s25, 1
      %p300 = scmp.ne.s32.totalorder %s295, %s297
      %p301 = scmp.eq.s32.totalorder %s25, 0
      %p302 = por %p300, %p301
      %p303 = scmp.ne.s32.totalorder %s295, %s297
      %p304 = scmp.eq.s32.totalorder %s30, 1
      %p305 = por %p303, %p304
      %p306 = scmp.ne.s32.totalorder %s297, %s298
      %p307 = scmp.eq.s32.totalorder %s30, 0
      %p308 = por %p306, %p307
      %p309 = scmp.ne.s32.totalorder %s297, %s298
      %p310 = scmp.eq.s32.totalorder %s31, 1
      %p311 = por %p309, %p310
      %p313 = scmp.ne.s32.totalorder %s298, %s312
      %p314 = scmp.eq.s32.totalorder %s31, 0
      %p315 = por %p313, %p314
      %s317 = sadd.s32 %s316, 1
      %p320 = scmp.eq.s32.totalorder %s25, 1
      %p321 = scmp.ne.s32.totalorder %s316, %s318
      %p322 = scmp.eq.s32.totalorder %s25, 0
      %p323 = por %p321, %p322
      %p324 = scmp.ne.s32.totalorder %s316, %s318
      %p325 = scmp.eq.s32.totalorder %s30, 1
      %p326 = por %p324, %p325
      %p327 = scmp.ne.s32.totalorder %s318, %s319
      %p328 = scmp.eq.s32.totalorder %s30, 0
      %p329 = por %p327, %p328
      %p330 = scmp.ne.s32.totalorder %s318, %s319
      %p331 = scmp.eq.s32.totalorder %s31, 1
      %p332 = por %p330, %p331
      %p334 = scmp.ne.s32.totalorder %s319, %s333
      %p335 = scmp.eq.s32.totalorder %s31, 0
      %p336 = por %p334, %p335
      %s337 = ssub.s32 %s25, %s32
      %p338 = scmp.eq.s32.totalorder %s337, 0
      %s340 = sadd.s32 %s339, 1
      %s341 = scalar_select %p338, %s339, %s340
      %p344 = pneg %p338
      %p345 = scmp.eq.s32.totalorder %s25, 1
      %p346 = por %p344, %p345
      %p347 = scmp.ne.s32.totalorder %s339, %s342
      %p348 = scmp.eq.s32.totalorder %s25, 0
      %p349 = por %p347, %p348
      %p350 = scmp.ne.s32.totalorder %s339, %s342
      %p351 = scmp.eq.s32.totalorder %s30, 1
      %p352 = por %p350, %p351
      %p353 = scmp.ne.s32.totalorder %s342, %s343
      %p354 = scmp.eq.s32.totalorder %s30, 0
      %p355 = por %p353, %p354
      %p356 = scmp.ne.s32.totalorder %s342, %s343
      %p357 = scmp.eq.s32.totalorder %s31, 1
      %p358 = por %p356, %p357
      %p360 = scmp.ne.s32.totalorder %s343, %s359
      %p361 = scmp.eq.s32.totalorder %s31, 0
      %p362 = por %p360, %p361
      %p363 = scmp.le.s32.totalorder 1, %s25
      %p364 = scmp.lt.s32.totalorder %s25, 3
      %p365 = pnand %p363, %p364
      %p366 = pneg %p365
      // Predicated region
      $region9: #{tpu_custom_call.1} parent=5 // pred_check
        _
      $region10: #{tpu_custom_call.1} parent=5 // pred_check_branch
        %368 = sbr.rel (%p365) target = $region12
      $region11: #{tpu_custom_call.1} parent=5 // pred_region
        %s369 = ssub.s32 %s25, 1
        // Predicated region
        $region13: #{tpu_custom_call.1} parent=11 // pred_check
          %p370 = pneg %p46
        $region14: #{tpu_custom_call.1} parent=11 // pred_check_branch
          %372 = sbr.rel (%p370) target = $region16
        $region15: #{tpu_custom_call.1} parent=11 // pred_region
          %s374 = ssub.s32 16, 16
          %375 = vsyncadd [#allocation5], %s374
          %s377 = sshll.u32 %s0, 4
          %s378 = int_to_ptr.vmem [resolvable:$true] %s377
          %380 = dma.vmem_to_smem %s378, 16, [#allocation2], [#allocation5]
        $region16: #{tpu_custom_call.1} parent=11 // pred_fallthru
          _
        // Predicated region
        $region17: #{tpu_custom_call.1} parent=11 // pred_check
          %p381 = pneg %p119
        $region18: #{tpu_custom_call.1} parent=11 // pred_check_branch
          %383 = sbr.rel (%p381) target = $region20
        $region19: #{tpu_custom_call.1} parent=11 // pred_region
          _
        $region20: #{tpu_custom_call.1} parent=11 // pred_fallthru
          _
        // Predicated region
        $region21: #{tpu_custom_call.1} parent=11 // pred_check
          %p384 = pneg %p140
        $region22: #{tpu_custom_call.1} parent=11 // pred_check_branch
          %386 = sbr.rel (%p384) target = $region24
        $region23: #{tpu_custom_call.1} parent=11 // pred_region
          _
        $region24: #{tpu_custom_call.1} parent=11 // pred_fallthru
          _
        // Predicated region
        $region25: #{tpu_custom_call.1} parent=11 // pred_check
          %p387 = pneg %p161
        $region26: #{tpu_custom_call.1} parent=11 // pred_check_branch
          %389 = sbr.rel (%p387) target = $region28
        $region27: #{tpu_custom_call.1} parent=11 // pred_region
          _
        $region28: #{tpu_custom_call.1} parent=11 // pred_fallthru
          _
        // Predicated region
        $region29: #{tpu_custom_call.1} parent=11 // pred_check
          %p390 = pneg %p182
        $region30: #{tpu_custom_call.1} parent=11 // pred_check_branch
          %392 = sbr.rel (%p390) target = $region32
        $region31: #{tpu_custom_call.1} parent=11 // pred_region
          _
        $region32: #{tpu_custom_call.1} parent=11 // pred_fallthru
          _
        // Predicated region
        $region33: #{tpu_custom_call.1} parent=11 // pred_check
          %p393 = pneg %p203
        $region34: #{tpu_custom_call.1} parent=11 // pred_check_branch
          %395 = sbr.rel (%p393) target = $region36
        $region35: #{tpu_custom_call.1} parent=11 // pred_region
          _
        $region36: #{tpu_custom_call.1} parent=11 // pred_fallthru
          _
        // Predicated region
        $region37: #{tpu_custom_call.1} parent=11 // pred_check
          %p396 = pneg %p224
        $region38: #{tpu_custom_call.1} parent=11 // pred_check_branch
          %398 = sbr.rel (%p396) target = $region40
        $region39: #{tpu_custom_call.1} parent=11 // pred_region
          %s400 = ssub.s32 1024, 1024
          %401 = vsyncadd [#allocation3], %s400
          %s402 = sshll.u32 [#allocation6], 4
          %s403 = int_to_ptr.vmem [resolvable:$true] %s402
          %408 = dma.hbm_to_vmem [thread:$0]  %s8, 1024, %s403, [#allocation3], 128, 128, 8
        $region40: #{tpu_custom_call.1} parent=11 // pred_fallthru
          _
        // Predicated region
        $region41: #{tpu_custom_call.1} parent=11 // pred_check
          %p409 = pneg %p245
        $region42: #{tpu_custom_call.1} parent=11 // pred_check_branch
          %411 = sbr.rel (%p409) target = $region44
        $region43: #{tpu_custom_call.1} parent=11 // pred_region
          _
        $region44: #{tpu_custom_call.1} parent=11 // pred_fallthru
          _
        // Predicated region
        $region45: #{tpu_custom_call.1} parent=11 // pred_check
          %p412 = pneg %p266
        $region46: #{tpu_custom_call.1} parent=11 // pred_check_branch
          %414 = sbr.rel (%p412) target = $region48
        $region47: #{tpu_custom_call.1} parent=11 // pred_region
          _
        $region48: #{tpu_custom_call.1} parent=11 // pred_fallthru
          _
        // Predicated region
        $region49: #{tpu_custom_call.1} parent=11 // pred_check
          %p415 = pneg %p287
        $region50: #{tpu_custom_call.1} parent=11 // pred_check_branch
          %417 = sbr.rel (%p415) target = $region52
        $region51: #{tpu_custom_call.1} parent=11 // pred_region
          _
        $region52: #{tpu_custom_call.1} parent=11 // pred_fallthru
          _
        // Predicated region
        $region53: #{tpu_custom_call.1} parent=11 // pred_check
          %p418 = pneg %p308
        $region54: #{tpu_custom_call.1} parent=11 // pred_check_branch
          %420 = sbr.rel (%p418) target = $region56
        $region55: #{tpu_custom_call.1} parent=11 // pred_region
          _
        $region56: #{tpu_custom_call.1} parent=11 // pred_fallthru
          _
        // Predicated region
        $region57: #{tpu_custom_call.1} parent=11 // pred_check
          %p421 = pneg %p329
        $region58: #{tpu_custom_call.1} parent=11 // pred_check_branch
          %423 = sbr.rel (%p421) target = $region60
        $region59: #{tpu_custom_call.1} parent=11 // pred_region
          _
        $region60: #{tpu_custom_call.1} parent=11 // pred_fallthru
          _
      $region12: #{tpu_custom_call.1} parent=5 // pred_fallthru
        _
      %p424 = scmp.lt.s32.totalorder %s25, 2
      // Predicated region
      $region61: #{tpu_custom_call.1} parent=5 // pred_check
        %p425 = pneg %p424
      $region62: #{tpu_custom_call.1} parent=5 // pred_check_branch
        %427 = sbr.rel (%p425) target = $region64
      $region63: #{tpu_custom_call.1} parent=5 // pred_region
        // Predicated region
        $region65: #{tpu_custom_call.1} parent=63 // pred_check
          %p428 = pneg %p66
        $region66: #{tpu_custom_call.1} parent=63 // pred_check_branch
          %430 = sbr.rel (%p428) target = $region68
        $region67: #{tpu_custom_call.1} parent=63 // pred_region
          %p431 = scmp.lt.s32.totalorder %s25, 1
          %s432 = scalar_select %p431, %s25, 1
          %s433 = smul.addr %s432, 8
          %s434 = scalar_lea.vmem %s1, %s433
        $region68: #{tpu_custom_call.1} parent=63 // pred_fallthru
          _
        // Predicated region
        $region69: #{tpu_custom_call.1} parent=63 // pred_check
          %p435 = pneg %p92
        $region70: #{tpu_custom_call.1} parent=63 // pred_check_branch
          %437 = sbr.rel (%p435) target = $region72
        $region71: #{tpu_custom_call.1} parent=63 // pred_region
          %p438 = scmp.lt.s32.totalorder %s25, 1
          %s439 = scalar_select %p438, %s25, 1
          %s440 = smul.addr %s439, 8
          %s441 = scalar_lea.vmem %s2, %s440
        $region72: #{tpu_custom_call.1} parent=63 // pred_fallthru
          _
      $region64: #{tpu_custom_call.1} parent=5 // pred_fallthru
        _
      %p442 = scmp.le.s32.totalorder 1, %s25
      %p443 = scmp.lt.s32.totalorder %s25, 3
      %p444 = pnand %p442, %p443
      %p445 = pneg %p444
      // Predicated region
      $region73: #{tpu_custom_call.1} parent=5 // pred_check
        _
      $region74: #{tpu_custom_call.1} parent=5 // pred_check_branch
        %447 = sbr.rel (%p444) target = $region76
      $region75: #{tpu_custom_call.1} parent=5 // pred_region
        %s448 = ssub.s32 %s25, 1
        // Predicated region
        $region77: #{tpu_custom_call.1} parent=75 // pred_check
          %p449 = pneg %p46
        $region78: #{tpu_custom_call.1} parent=75 // pred_check_branch
          %451 = sbr.rel (%p449) target = $region80
        $region79: #{tpu_custom_call.1} parent=75 // pred_region
          %452 = dma.done [#allocation5], 16
        $region80: #{tpu_custom_call.1} parent=75 // pred_fallthru
          _
        // Predicated region
        $region81: #{tpu_custom_call.1} parent=75 // pred_check
          %p453 = pneg %p224
        $region82: #{tpu_custom_call.1} parent=75 // pred_check_branch
          %455 = sbr.rel (%p453) target = $region84
        $region83: #{tpu_custom_call.1} parent=75 // pred_region
          %456 = dma.done [#allocation3], 1024
        $region84: #{tpu_custom_call.1} parent=75 // pred_fallthru
          _
        %457 = sfence
        %p458 = pneg %p46
        %p459 = pneg %p43
        %p460 = scmp.lt.s32.totalorder %s30, 1
        %s461 = scalar_select %p460, %s30, 1
        %s462 = smul.addr %s461, 8
        %s463 = scalar_lea.vmem %s1, %s462
        %p464 = pneg %p72
        %p465 = pneg %p69
        %p466 = scmp.lt.s32.totalorder %s30, 1
        %s467 = scalar_select %p466, %s30, 1
        %s468 = smul.addr %s467, 8
        %s469 = scalar_lea.vmem %s2, %s468
        %p470 = pneg %p98
        %p471 = pneg %p95
        %p472 = pneg %p119
        %p473 = pneg %p116
        %p474 = pneg %p140
        %p475 = pneg %p137
        %p476 = pneg %p161
        %p477 = pneg %p158
        %p478 = pneg %p182
        %p479 = pneg %p179
        %p480 = pneg %p203
        %p481 = pneg %p200
        %p482 = pneg %p224
        %p483 = pneg %p221
        %p484 = pneg %p245
        %p485 = pneg %p242
        %p486 = pneg %p266
        %p487 = pneg %p263
        %p488 = pneg %p287
        %p489 = pneg %p284
        %p490 = pneg %p308
        %p491 = pneg %p305
        %p492 = pneg %p329
        %p493 = pneg %p326
        %p494 = pneg %p355
        %p495 = pneg %p352
        %s496 = sand.u32 %s342, 1
        %s497 = scalar_lea.sflag [#allocation4], %s496
        %s498 = sand.u32 %s342, 1
        %s499 = smul.addr %s498, 8
        %s500 = scalar_lea.vmem [#allocation7], %s499
        %p501 = scmp.lt.s32.totalorder %s30, 1
        %s502 = scalar_select %p501, %s30, 1
        %s503 = smul.addr %s502, 8
        %s504 = scalar_lea.vmem %s1, %s503
        %p505 = scmp.lt.s32.totalorder %s30, 1
        %s506 = scalar_select %p505, %s30, 1
        %s507 = smul.addr %s506, 8
        %s508 = scalar_lea.vmem %s2, %s507
        %v509 = vld [vmem:[%s504] sm:$0xff]
        %v510 = vld [vmem:[%s508] sm:$0xff]
        %v511 = vld [vmem:[%s3] sm:$0x3]
        %513 = vset.pattern.permute.xlu0 0
        %514 = vperm.xlu0 %513, %v509
        %v515 = vpop.permute.xlu0 %514
        %v517 = vlaneseq
        %v518 = vshrl.u32 %v517, 7
        %v519 = vsub.s32 0, %v518
        %v520 = vrot.slane %v511, %v519
        %v521 = vmul.f32 %v515, %v520
        %522 = vset.pattern.permute.xlu0 1
        %523 = vperm.xlu0 %522, %v509
        %v524 = vpop.permute.xlu0 %523
        %v526 = vlaneseq
        %v527 = vshrl.u32 %v526, 7
        %v528 = vsub.s32 1, %v527
        %v529 = vrot.slane %v511, %v528
        %v530 = vmul.f32 %v524, %v529
        %v531 = vadd.f32 %v521, %v530
        %v532 = vld [vmem:[%s4] sm:$0x1]
        %v534 = vlaneseq
        %v535 = vshrl.u32 %v534, 7
        %v536 = vsub.s32 0, %v535
        %v537 = vrot.slane %v532, %v536
        %v539 = vadd.f32 %v531, %v537
        %s540 = sld [smem:[#allocation2]]
        %v541 = vld [vmem:[%s5] sm:$0xff]
        %v542 = vld [vmem:[%s5 + $0x8] sm:$0xff]
        %v543 = vld [vmem:[%s5 + $0x10] sm:$0xff]
        %v544 = vld [vmem:[%s5 + $0x18] sm:$0xff]
        %vm545 = vcmask 261120
        %v547 = vsel %vm545, %v539, 0
        %549 = vmatprep.subr.mxu0 0.0
        %550 = vmatpush1.msra.mxu0 %v541
        %551 = vmatprep.subr.mxu0 0.0
        %552 = vmatpush1.msra.mxu0 %v542
        %553 = vmatprep.subr.mxu0 0.0
        %554 = vmatpush1.msra.mxu0 %v543
        %555 = vmatprep.subr.mxu0 0.0
        %556 = vmatpush1.msra.mxu0 %v544
        %557 = vmatprep.subr.mxu0 0.0
        %558 = vmatpush1.msra.mxu0 0.0
        %559 = vmatprep.subr.mxu0 0.0
        %560 = vmatpush1.msra.mxu0 0.0
        %561 = vmatprep.subr.mxu0 0.0
        %562 = vmatpush1.msra.mxu0 0.0
        %563 = vmatprep.subr.mxu0 0.0
        %564 = vmatpush1.msra.mxu0 0.0
        %565 = vmatprep.subr.mxu0 0.0
        %566 = vmatpush1.msra.mxu0 0.0
        %567 = vmatprep.subr.mxu0 0.0
        %568 = vmatpush1.msra.mxu0 0.0
        %569 = vmatprep.subr.mxu0 0.0
        %570 = vmatpush1.msra.mxu0 0.0
        %571 = vmatprep.subr.mxu0 0.0
        %572 = vmatpush1.msra.mxu0 0.0
        %573 = vmatprep.subr.mxu0 0.0
        %574 = vmatpush1.msra.mxu0 0.0
        %575 = vmatprep.subr.mxu0 0.0
        %576 = vmatpush1.msra.mxu0 0.0
        %577 = vmatprep.subr.mxu0 0.0
        %578 = vmatpush1.msra.mxu0 0.0
        %579 = vmatprep.subr.mxu0 0.0
        %580 = vmatpush1.msra.mxu0 0.0
        %581 = vmatprep.subr.mxu0 0.0
        %582 = vmatpush1.msra.mxu0 0.0
        %583 = vmatprep.subr.mxu0 0.0
        %584 = vmatpush1.msra.mxu0 0.0
        %585 = vmatprep.subr.mxu0 0.0
        %586 = vmatpush1.msra.mxu0 0.0
        %587 = vmatprep.subr.mxu0 0.0
        %588 = vmatpush1.msra.mxu0 0.0
        %589 = vmatprep.subr.mxu0 0.0
        %590 = vmatpush1.msra.mxu0 0.0
        %591 = vmatprep.subr.mxu0 0.0
        %592 = vmatpush1.msra.mxu0 0.0
        %593 = vmatprep.subr.mxu0 0.0
        %594 = vmatpush1.msra.mxu0 0.0
        %595 = vmatprep.subr.mxu0 0.0
        %596 = vmatpush1.msra.mxu0 0.0
        %597 = vmatprep.subr.mxu0 0.0
        %598 = vmatpush1.msra.mxu0 0.0
        %599 = vmatprep.subr.mxu0 0.0
        %600 = vmatpush1.msra.mxu0 0.0
        %601 = vmatprep.subr.mxu0 0.0
        %602 = vmatpush1.msra.mxu0 0.0
        %603 = vmatprep.subr.mxu0 0.0
        %604 = vmatpush1.msra.mxu0 0.0
        %605 = vmatprep.subr.mxu0 0.0
        %606 = vmatpush1.msra.mxu0 0.0
        %607 = vmatprep.subr.mxu0 0.0
        %608 = vmatpush1.msra.mxu0 0.0
        %609 = vmatprep.subr.mxu0 0.0
        %610 = vmatpush1.msra.mxu0 0.0
        %611 = vmatprep.subr.mxu0 0.0
        %612 = vmatpush1.msra.mxu0 0.0
        %613 = vmatprep.mubr.f32.mxu0 0.0
        %614 = vmatmul.mubr.f32.gmra.mrb[0].mxu0 %v547
        %v615 = vpop.f32.mrb[0].mxu0
        %v616 = vadd.f32 0.0, %v615
        %v617 = vpop.f32.mrb[0].mxu0
        %618 = vdwg.mxu0
        %s619 = scalar_lea.vmem %s5, 32
        %v620 = vld [vmem:[%s619] sm:$0xff]
        %v621 = vld [vmem:[%s619 + $0x8] sm:$0xff]
        %v622 = vld [vmem:[%s619 + $0x10] sm:$0xff]
        %v623 = vld [vmem:[%s619 + $0x18] sm:$0xff]
        %624 = vmatprep.subr.mxu0 0.0
        %625 = vmatpush1.msra.mxu0 %v620
        %626 = vmatprep.subr.mxu0 0.0
        %627 = vmatpush1.msra.mxu0 %v621
        %628 = vmatprep.subr.mxu0 0.0
        %629 = vmatpush1.msra.mxu0 %v622
        %630 = vmatprep.subr.mxu0 0.0
        %631 = vmatpush1.msra.mxu0 %v623
        %632 = vmatprep.subr.mxu0 0.0
        %633 = vmatpush1.msra.mxu0 0.0
        %634 = vmatprep.subr.mxu0 0.0
        %635 = vmatpush1.msra.mxu0 0.0
        %636 = vmatprep.subr.mxu0 0.0
        %637 = vmatpush1.msra.mxu0 0.0
        %638 = vmatprep.subr.mxu0 0.0
        %639 = vmatpush1.msra.mxu0 0.0
        %640 = vmatprep.subr.mxu0 0.0
        %641 = vmatpush1.msra.mxu0 0.0
        %642 = vmatprep.subr.mxu0 0.0
        %643 = vmatpush1.msra.mxu0 0.0
        %644 = vmatprep.subr.mxu0 0.0
        %645 = vmatpush1.msra.mxu0 0.0
        %646 = vmatprep.subr.mxu0 0.0
        %647 = vmatpush1.msra.mxu0 0.0
        %648 = vmatprep.subr.mxu0 0.0
        %649 = vmatpush1.msra.mxu0 0.0
        %650 = vmatprep.subr.mxu0 0.0
        %651 = vmatpush1.msra.mxu0 0.0
        %652 = vmatprep.subr.mxu0 0.0
        %653 = vmatpush1.msra.mxu0 0.0
        %654 = vmatprep.subr.mxu0 0.0
        %655 = vmatpush1.msra.mxu0 0.0
        %656 = vmatprep.subr.mxu0 0.0
        %657 = vmatpush1.msra.mxu0 0.0
        %658 = vmatprep.subr.mxu0 0.0
        %659 = vmatpush1.msra.mxu0 0.0
        %660 = vmatprep.subr.mxu0 0.0
        %661 = vmatpush1.msra.mxu0 0.0
        %662 = vmatprep.subr.mxu0 0.0
        %663 = vmatpush1.msra.mxu0 0.0
        %664 = vmatprep.subr.mxu0 0.0
        %665 = vmatpush1.msra.mxu0 0.0
        %666 = vmatprep.subr.mxu0 0.0
        %667 = vmatpush1.msra.mxu0 0.0
        %668 = vmatprep.subr.mxu0 0.0
        %669 = vmatpush1.msra.mxu0 0.0
        %670 = vmatprep.subr.mxu0 0.0
        %671 = vmatpush1.msra.mxu0 0.0
        %672 = vmatprep.subr.mxu0 0.0
        %673 = vmatpush1.msra.mxu0 0.0
        %674 = vmatprep.subr.mxu0 0.0
        %675 = vmatpush1.msra.mxu0 0.0
        %676 = vmatprep.subr.mxu0 0.0
        %677 = vmatpush1.msra.mxu0 0.0
        %678 = vmatprep.subr.mxu0 0.0
        %679 = vmatpush1.msra.mxu0 0.0
        %680 = vmatprep.subr.mxu0 0.0
        %681 = vmatpush1.msra.mxu0 0.0
        %682 = vmatprep.subr.mxu0 0.0
        %683 = vmatpush1.msra.mxu0 0.0
        %684 = vmatprep.subr.mxu0 0.0
        %685 = vmatpush1.msra.mxu0 0.0
        %686 = vmatprep.subr.mxu0 0.0
        %687 = vmatpush1.msra.mxu0 0.0
        %688 = vmatprep.mubr.f32.mxu0 0.0
        %689 = vmatmul.mubr.f32.gmra.mrb[0].mxu0 %v547
        %v690 = vpop.f32.mrb[0].mxu0
        %v691 = vadd.f32 0.0, %v690
        %v692 = vpop.f32.mrb[0].mxu0
        %693 = vdwg.mxu0
        %s694 = scalar_lea.vmem %s5, 64
        %v695 = vld [vmem:[%s694] sm:$0xff]
        %v696 = vld [vmem:[%s694 + $0x8] sm:$0xff]
        %v697 = vld [vmem:[%s694 + $0x10] sm:$0xff]
        %v698 = vld [vmem:[%s694 + $0x18] sm:$0xff]
        %699 = vmatprep.subr.mxu0 0.0
        %700 = vmatpush1.msra.mxu0 %v695
        %701 = vmatprep.subr.mxu0 0.0
        %702 = vmatpush1.msra.mxu0 %v696
        %703 = vmatprep.subr.mxu0 0.0
        %704 = vmatpush1.msra.mxu0 %v697
        %705 = vmatprep.subr.mxu0 0.0
        %706 = vmatpush1.msra.mxu0 %v698
        %707 = vmatprep.subr.mxu0 0.0
        %708 = vmatpush1.msra.mxu0 0.0
        %709 = vmatprep.subr.mxu0 0.0
        %710 = vmatpush1.msra.mxu0 0.0
        %711 = vmatprep.subr.mxu0 0.0
        %712 = vmatpush1.msra.mxu0 0.0
        %713 = vmatprep.subr.mxu0 0.0
        %714 = vmatpush1.msra.mxu0 0.0
        %715 = vmatprep.subr.mxu0 0.0
        %716 = vmatpush1.msra.mxu0 0.0
        %717 = vmatprep.subr.mxu0 0.0
        %718 = vmatpush1.msra.mxu0 0.0
        %719 = vmatprep.subr.mxu0 0.0
        %720 = vmatpush1.msra.mxu0 0.0
        %721 = vmatprep.subr.mxu0 0.0
        %722 = vmatpush1.msra.mxu0 0.0
        %723 = vmatprep.subr.mxu0 0.0
        %724 = vmatpush1.msra.mxu0 0.0
        %725 = vmatprep.subr.mxu0 0.0
        %726 = vmatpush1.msra.mxu0 0.0
        %727 = vmatprep.subr.mxu0 0.0
        %728 = vmatpush1.msra.mxu0 0.0
        %729 = vmatprep.subr.mxu0 0.0
        %730 = vmatpush1.msra.mxu0 0.0
        %731 = vmatprep.subr.mxu0 0.0
        %732 = vmatpush1.msra.mxu0 0.0
        %733 = vmatprep.subr.mxu0 0.0
        %734 = vmatpush1.msra.mxu0 0.0
        %735 = vmatprep.subr.mxu0 0.0
        %736 = vmatpush1.msra.mxu0 0.0
        %737 = vmatprep.subr.mxu0 0.0
        %738 = vmatpush1.msra.mxu0 0.0
        %739 = vmatprep.subr.mxu0 0.0
        %740 = vmatpush1.msra.mxu0 0.0
        %741 = vmatprep.subr.mxu0 0.0
        %742 = vmatpush1.msra.mxu0 0.0
        %743 = vmatprep.subr.mxu0 0.0
        %744 = vmatpush1.msra.mxu0 0.0
        %745 = vmatprep.subr.mxu0 0.0
        %746 = vmatpush1.msra.mxu0 0.0
        %747 = vmatprep.subr.mxu0 0.0
        %748 = vmatpush1.msra.mxu0 0.0
        %749 = vmatprep.subr.mxu0 0.0
        %750 = vmatpush1.msra.mxu0 0.0
        %751 = vmatprep.subr.mxu0 0.0
        %752 = vmatpush1.msra.mxu0 0.0
        %753 = vmatprep.subr.mxu0 0.0
        %754 = vmatpush1.msra.mxu0 0.0
        %755 = vmatprep.subr.mxu0 0.0
        %756 = vmatpush1.msra.mxu0 0.0
        %757 = vmatprep.subr.mxu0 0.0
        %758 = vmatpush1.msra.mxu0 0.0
        %759 = vmatprep.subr.mxu0 0.0
        %760 = vmatpush1.msra.mxu0 0.0
        %761 = vmatprep.subr.mxu0 0.0
        %762 = vmatpush1.msra.mxu0 0.0
        %763 = vmatprep.mubr.f32.mxu0 0.0
        %764 = vmatmul.mubr.f32.gmra.mrb[0].mxu0 %v547
        %v765 = vpop.f32.mrb[0].mxu0
        %v766 = vadd.f32 0.0, %v765
        %v767 = vpop.f32.mrb[0].mxu0
        %768 = vdwg.mxu0
        %v769 = vstv %s540
        %v770 = vmul.f32 %v769, %v510
        %vm771 = vcmask 64512
        %v772 = vsel %vm771, %v770, -inf
        %773 = vmax.xlane.f32.xlu0 %v772
        %v774 = vpop.xlane.xlu0 %773
        %v775 = vsub.f32 %v770, %v774
        %v776 = vsel %vm545, %v691, -inf
        %v777 = vrot.slane %v776, 4
        %v778 = vmax.f32 %v776, %v777
        %v779 = vrot.slane %v778, 2
        %v780 = vmax.f32 %v778, %v779
        %v781 = vrot.slane %v780, 1
        %v782 = vmax.f32 %v780, %v781
        %v783 = vsub.f32 %v691, %v782
        %v784 = vmul.f32 %v775, 1.442695
        %v785 = vpow.pop %v784
        %v786 = vmul.f32 %v783, 1.442695
        %v787 = vpow.pop %v786
        %v788 = vmul.f32 %v787, %v766
        %v790 = vsel %vm771, %v785, 0
        %792 = vmatprep.subr.mxu0 0.0
        %793 = vmatpush1.msra.mxu0 %v788
        %794 = vmatprep.subr.mxu0 0.0
        %795 = vmatpush1.msra.mxu0 0.0
        %796 = vmatprep.subr.mxu0 0.0
        %797 = vmatpush1.msra.mxu0 0.0
        %798 = vmatprep.subr.mxu0 0.0
        %799 = vmatpush1.msra.mxu0 0.0
        %800 = vmatprep.subr.mxu0 0.0
        %801 = vmatpush1.msra.mxu0 0.0
        %802 = vmatprep.subr.mxu0 0.0
        %803 = vmatpush1.msra.mxu0 0.0
        %804 = vmatprep.subr.mxu0 0.0
        %805 = vmatpush1.msra.mxu0 0.0
        %806 = vmatprep.subr.mxu0 0.0
        %807 = vmatpush1.msra.mxu0 0.0
        %808 = vmatprep.subr.mxu0 0.0
        %809 = vmatpush1.msra.mxu0 0.0
        %810 = vmatprep.subr.mxu0 0.0
        %811 = vmatpush1.msra.mxu0 0.0
        %812 = vmatprep.subr.mxu0 0.0
        %813 = vmatpush1.msra.mxu0 0.0
        %814 = vmatprep.subr.mxu0 0.0
        %815 = vmatpush1.msra.mxu0 0.0
        %816 = vmatprep.subr.mxu0 0.0
        %817 = vmatpush1.msra.mxu0 0.0
        %818 = vmatprep.subr.mxu0 0.0
        %819 = vmatpush1.msra.mxu0 0.0
        %820 = vmatprep.subr.mxu0 0.0
        %821 = vmatpush1.msra.mxu0 0.0
        %822 = vmatprep.subr.mxu0 0.0
        %823 = vmatpush1.msra.mxu0 0.0
        %824 = vmatprep.subr.mxu0 0.0
        %825 = vmatpush1.msra.mxu0 0.0
        %826 = vmatprep.subr.mxu0 0.0
        %827 = vmatpush1.msra.mxu0 0.0
        %828 = vmatprep.subr.mxu0 0.0
        %829 = vmatpush1.msra.mxu0 0.0
        %830 = vmatprep.subr.mxu0 0.0
        %831 = vmatpush1.msra.mxu0 0.0
        %832 = vmatprep.subr.mxu0 0.0
        %833 = vmatpush1.msra.mxu0 0.0
        %834 = vmatprep.subr.mxu0 0.0
        %835 = vmatpush1.msra.mxu0 0.0
        %836 = vmatprep.subr.mxu0 0.0
        %837 = vmatpush1.msra.mxu0 0.0
        %838 = vmatprep.subr.mxu0 0.0
        %839 = vmatpush1.msra.mxu0 0.0
        %840 = vmatprep.subr.mxu0 0.0
        %841 = vmatpush1.msra.mxu0 0.0
        %842 = vmatprep.subr.mxu0 0.0
        %843 = vmatpush1.msra.mxu0 0.0
        %844 = vmatprep.subr.mxu0 0.0
        %845 = vmatpush1.msra.mxu0 0.0
        %846 = vmatprep.subr.mxu0 0.0
        %847 = vmatpush1.msra.mxu0 0.0
        %848 = vmatprep.subr.mxu0 0.0
        %849 = vmatpush1.msra.mxu0 0.0
        %850 = vmatprep.subr.mxu0 0.0
        %851 = vmatpush1.msra.mxu0 0.0
        %852 = vmatprep.subr.mxu0 0.0
        %853 = vmatpush1.msra.mxu0 0.0
        %854 = vmatprep.subr.mxu0 0.0
        %855 = vmatpush1.msra.mxu0 0.0
        %856 = vmatprep.mubr.f32.mxu0 0.0
        %857 = vmatmul.mubr.f32.gmra.mrb[0].mxu0 %v790
        %v858 = vpop.f32.mrb[0].mxu0
        %v859 = vadd.f32 0.0, %v858
        %v860 = vpop.f32.mrb[0].mxu0
        %861 = vdwg.mxu0
        %862 = vmatprep.subr.mxu0 0.0
        %863 = vmatpush1.msra.mxu0 %v787
        %864 = vmatprep.subr.mxu0 0.0
        %865 = vmatpush1.msra.mxu0 0.0
        %866 = vmatprep.subr.mxu0 0.0
        %867 = vmatpush1.msra.mxu0 0.0
        %868 = vmatprep.subr.mxu0 0.0
        %869 = vmatpush1.msra.mxu0 0.0
        %870 = vmatprep.subr.mxu0 0.0
        %871 = vmatpush1.msra.mxu0 0.0
        %872 = vmatprep.subr.mxu0 0.0
        %873 = vmatpush1.msra.mxu0 0.0
        %874 = vmatprep.subr.mxu0 0.0
        %875 = vmatpush1.msra.mxu0 0.0
        %876 = vmatprep.subr.mxu0 0.0
        %877 = vmatpush1.msra.mxu0 0.0
        %878 = vmatprep.subr.mxu0 0.0
        %879 = vmatpush1.msra.mxu0 0.0
        %880 = vmatprep.subr.mxu0 0.0
        %881 = vmatpush1.msra.mxu0 0.0
        %882 = vmatprep.subr.mxu0 0.0
        %883 = vmatpush1.msra.mxu0 0.0
        %884 = vmatprep.subr.mxu0 0.0
        %885 = vmatpush1.msra.mxu0 0.0
        %886 = vmatprep.subr.mxu0 0.0
        %887 = vmatpush1.msra.mxu0 0.0
        %888 = vmatprep.subr.mxu0 0.0
        %889 = vmatpush1.msra.mxu0 0.0
        %890 = vmatprep.subr.mxu0 0.0
        %891 = vmatpush1.msra.mxu0 0.0
        %892 = vmatprep.subr.mxu0 0.0
        %893 = vmatpush1.msra.mxu0 0.0
        %894 = vmatprep.subr.mxu0 0.0
        %895 = vmatpush1.msra.mxu0 0.0
        %896 = vmatprep.subr.mxu0 0.0
        %897 = vmatpush1.msra.mxu0 0.0
        %898 = vmatprep.subr.mxu0 0.0
        %899 = vmatpush1.msra.mxu0 0.0
        %900 = vmatprep.subr.mxu0 0.0
        %901 = vmatpush1.msra.mxu0 0.0
        %902 = vmatprep.subr.mxu0 0.0
        %903 = vmatpush1.msra.mxu0 0.0
        %904 = vmatprep.subr.mxu0 0.0
        %905 = vmatpush1.msra.mxu0 0.0
        %906 = vmatprep.subr.mxu0 0.0
        %907 = vmatpush1.msra.mxu0 0.0
        %908 = vmatprep.subr.mxu0 0.0
        %909 = vmatpush1.msra.mxu0 0.0
        %910 = vmatprep.subr.mxu0 0.0
        %911 = vmatpush1.msra.mxu0 0.0
        %912 = vmatprep.subr.mxu0 0.0
        %913 = vmatpush1.msra.mxu0 0.0
        %914 = vmatprep.subr.mxu0 0.0
        %915 = vmatpush1.msra.mxu0 0.0
        %916 = vmatprep.subr.mxu0 0.0
        %917 = vmatpush1.msra.mxu0 0.0
        %918 = vmatprep.subr.mxu0 0.0
        %919 = vmatpush1.msra.mxu0 0.0
        %920 = vmatprep.subr.mxu0 0.0
        %921 = vmatpush1.msra.mxu0 0.0
        %922 = vmatprep.subr.mxu0 0.0
        %923 = vmatpush1.msra.mxu0 0.0
        %924 = vmatprep.subr.mxu0 0.0
        %925 = vmatpush1.msra.mxu0 0.0
        %926 = vmatprep.mubr.f32.mxu0 0.0
        %927 = vmatmul.mubr.f32.gmra.mrb[0].mxu0 %v790
        %v928 = vpop.f32.mrb[0].mxu0
        %v929 = vadd.f32 0.0, %v928
        %v930 = vpop.f32.mrb[0].mxu0
        %931 = vdwg.mxu0
        %v932 = vxor.u32 %v616, 2147483648
        %v933 = vmul.f32 %v932, 1.442695
        %v934 = vpow.pop %v933
        %v935 = vadd.f32 %v934, 1.0
        %v936 = vrcp.pop %v935
        %v937 = vmul.f32 1.0, %v936
        %v938 = vrcp.pop %v929
        %v939 = vmul.f32 %v859, %v938
        %v940 = vmul.f32 %v937, %v939
        %v941 = vadd.f32 %v539, %v940
        %v942 = vld [vmem:[%s6] sm:$0x1]
        %v943 = vld [vmem:[%s7] sm:$0x1]
        %v944 = vsel %vm545, %v941, 0.0
        %v945 = vrot.slane %v944, 4
        %v946 = vadd.f32 %v944, %v945
        %v947 = vrot.slane %v946, 2
        %v948 = vadd.f32 %v946, %v947
        %v949 = vrot.slane %v948, 1
        %v950 = vadd.f32 %v948, %v949
        %v951 = vmul.f32 %v950, 0.125
        %v952 = vmul.f32 %v941, %v941
        %v953 = vsel %vm545, %v952, 0.0
        %v954 = vrot.slane %v953, 4
        %v955 = vadd.f32 %v953, %v954
        %v956 = vrot.slane %v955, 2
        %v957 = vadd.f32 %v955, %v956
        %v958 = vrot.slane %v957, 1
        %v959 = vadd.f32 %v957, %v958
        %v960 = vmul.f32 %v959, 0.125
        %v961 = vmul.f32 %v951, %v951
        %v962 = vsub.f32 %v960, %v961
        %v963 = vsub.f32 %v941, %v951
        %v964 = vadd.f32 %v962, 1e-05
        %v965 = vrsqrt.pop %v964
        %v966 = vmul.f32 %v963, %v965
        %v968 = vlaneseq
        %v969 = vshrl.u32 %v968, 7
        %v970 = vsub.s32 0, %v969
        %v971 = vrot.slane %v942, %v970
        %v973 = vmul.f32 %v966, %v971
        %v975 = vlaneseq
        %v976 = vshrl.u32 %v975, 7
        %v977 = vsub.s32 0, %v976
        %v978 = vrot.slane %v943, %v977
        %v980 = vadd.f32 %v973, %v978
        %v981 = vld [vmem:[#allocation6] sm:$0xff]
        %v982 = vld [vmem:[#allocation6 + $0x8] sm:$0xff]
        %v983 = vld [vmem:[#allocation6 + $0x10] sm:$0xff]
        %v984 = vld [vmem:[#allocation6 + $0x18] sm:$0xff]
        %v985 = vld [vmem:[%s9] sm:$0x1]
        %v987 = vlaneseq
        %v988 = vshrl.u32 %v987, 7
        %v989 = vsub.s32 0, %v988
        %v990 = vrot.slane %v985, %v989
        %v993 = vsel %vm545, %v980, 0
        %995 = vmatprep.subr.mxu0 0.0
        %996 = vmatpush1.msra.mxu0 %v981
        %997 = vmatprep.subr.mxu0 0.0
        %998 = vmatpush1.msra.mxu0 %v982
        %999 = vmatprep.subr.mxu0 0.0
        %1000 = vmatpush1.msra.mxu0 %v983
        %1001 = vmatprep.subr.mxu0 0.0
        %1002 = vmatpush1.msra.mxu0 %v984
        %1003 = vmatprep.subr.mxu0 0.0
        %1004 = vmatpush1.msra.mxu0 0.0
        %1005 = vmatprep.subr.mxu0 0.0
        %1006 = vmatpush1.msra.mxu0 0.0
        %1007 = vmatprep.subr.mxu0 0.0
        %1008 = vmatpush1.msra.mxu0 0.0
        %1009 = vmatprep.subr.mxu0 0.0
        %1010 = vmatpush1.msra.mxu0 0.0
        %1011 = vmatprep.subr.mxu0 0.0
        %1012 = vmatpush1.msra.mxu0 0.0
        %1013 = vmatprep.subr.mxu0 0.0
        %1014 = vmatpush1.msra.mxu0 0.0
        %1015 = vmatprep.subr.mxu0 0.0
        %1016 = vmatpush1.msra.mxu0 0.0
        %1017 = vmatprep.subr.mxu0 0.0
        %1018 = vmatpush1.msra.mxu0 0.0
        %1019 = vmatprep.subr.mxu0 0.0
        %1020 = vmatpush1.msra.mxu0 0.0
        %1021 = vmatprep.subr.mxu0 0.0
        %1022 = vmatpush1.msra.mxu0 0.0
        %1023 = vmatprep.subr.mxu0 0.0
        %1024 = vmatpush1.msra.mxu0 0.0
        %1025 = vmatprep.subr.mxu0 0.0
        %1026 = vmatpush1.msra.mxu0 0.0
        %1027 = vmatprep.subr.mxu0 0.0
        %1028 = vmatpush1.msra.mxu0 0.0
        %1029 = vmatprep.subr.mxu0 0.0
        %1030 = vmatpush1.msra.mxu0 0.0
        %1031 = vmatprep.subr.mxu0 0.0
        %1032 = vmatpush1.msra.mxu0 0.0
        %1033 = vmatprep.subr.mxu0 0.0
        %1034 = vmatpush1.msra.mxu0 0.0
        %1035 = vmatprep.subr.mxu0 0.0
        %1036 = vmatpush1.msra.mxu0 0.0
        %1037 = vmatprep.subr.mxu0 0.0
        %1038 = vmatpush1.msra.mxu0 0.0
        %1039 = vmatprep.subr.mxu0 0.0
        %1040 = vmatpush1.msra.mxu0 0.0
        %1041 = vmatprep.subr.mxu0 0.0
        %1042 = vmatpush1.msra.mxu0 0.0
        %1043 = vmatprep.subr.mxu0 0.0
        %1044 = vmatpush1.msra.mxu0 0.0
        %1045 = vmatprep.subr.mxu0 0.0
        %1046 = vmatpush1.msra.mxu0 0.0
        %1047 = vmatprep.subr.mxu0 0.0
        %1048 = vmatpush1.msra.mxu0 0.0
        %1049 = vmatprep.subr.mxu0 0.0
        %1050 = vmatpush1.msra.mxu0 0.0
        %1051 = vmatprep.subr.mxu0 0.0
        %1052 = vmatpush1.msra.mxu0 0.0
        %1053 = vmatprep.subr.mxu0 0.0
        %1054 = vmatpush1.msra.mxu0 0.0
        %1055 = vmatprep.subr.mxu0 0.0
        %1056 = vmatpush1.msra.mxu0 0.0
        %1057 = vmatprep.subr.mxu0 0.0
        %1058 = vmatpush1.msra.mxu0 0.0
        %1059 = vmatprep.mubr.f32.mxu0 0.0
        %1060 = vmatmul.mubr.f32.gmra.mrb[0].mxu0 %v993
        %v1061 = vpop.f32.mrb[0].mxu0
        %v1062 = vadd.f32 %v990, %v1061
        %v1063 = vpop.f32.mrb[0].mxu0
        %1064 = vdwg.mxu0
        %v1065 = vmax.f32 %v1062, 0.0
        %v1066 = vld [vmem:[%s10] sm:$0xff]
        %v1067 = vld [vmem:[%s10 + $0x8] sm:$0xff]
        %v1068 = vld [vmem:[%s10 + $0x10] sm:$0xff]
        %v1069 = vld [vmem:[%s10 + $0x18] sm:$0xff]
        %v1070 = vld [vmem:[%s10 + $0x20] sm:$0xff]
        %v1071 = vld [vmem:[%s10 + $0x28] sm:$0xff]
        %v1072 = vld [vmem:[%s10 + $0x30] sm:$0xff]
        %v1073 = vld [vmem:[%s10 + $0x38] sm:$0xff]
        %v1074 = vld [vmem:[%s11] sm:$0x1]
        %v1076 = vlaneseq
        %v1077 = vshrl.u32 %v1076, 7
        %v1078 = vsub.s32 0, %v1077
        %v1079 = vrot.slane %v1074, %v1078
        %vm1081 = vcmask 523264
        %v1083 = vsel %vm1081, %v1065, 0
        %1085 = vmatprep.subr.mxu0 0.0
        %1086 = vmatpush1.msra.mxu0 %v1066
        %1087 = vmatprep.subr.mxu0 0.0
        %1088 = vmatpush1.msra.mxu0 %v1067
        %1089 = vmatprep.subr.mxu0 0.0
        %1090 = vmatpush1.msra.mxu0 %v1068
        %1091 = vmatprep.subr.mxu0 0.0
        %1092 = vmatpush1.msra.mxu0 %v1069
        %1093 = vmatprep.subr.mxu0 0.0
        %1094 = vmatpush1.msra.mxu0 %v1070
        %1095 = vmatprep.subr.mxu0 0.0
        %1096 = vmatpush1.msra.mxu0 %v1071
        %1097 = vmatprep.subr.mxu0 0.0
        %1098 = vmatpush1.msra.mxu0 %v1072
        %1099 = vmatprep.subr.mxu0 0.0
        %1100 = vmatpush1.msra.mxu0 %v1073
        %1101 = vmatprep.subr.mxu0 0.0
        %1102 = vmatpush1.msra.mxu0 0.0
        %1103 = vmatprep.subr.mxu0 0.0
        %1104 = vmatpush1.msra.mxu0 0.0
        %1105 = vmatprep.subr.mxu0 0.0
        %1106 = vmatpush1.msra.mxu0 0.0
        %1107 = vmatprep.subr.mxu0 0.0
        %1108 = vmatpush1.msra.mxu0 0.0
        %1109 = vmatprep.subr.mxu0 0.0
        %1110 = vmatpush1.msra.mxu0 0.0
        %1111 = vmatprep.subr.mxu0 0.0
        %1112 = vmatpush1.msra.mxu0 0.0
        %1113 = vmatprep.subr.mxu0 0.0
        %1114 = vmatpush1.msra.mxu0 0.0
        %1115 = vmatprep.subr.mxu0 0.0
        %1116 = vmatpush1.msra.mxu0 0.0
        %1117 = vmatprep.subr.mxu0 0.0
        %1118 = vmatpush1.msra.mxu0 0.0
        %1119 = vmatprep.subr.mxu0 0.0
        %1120 = vmatpush1.msra.mxu0 0.0
        %1121 = vmatprep.subr.mxu0 0.0
        %1122 = vmatpush1.msra.mxu0 0.0
        %1123 = vmatprep.subr.mxu0 0.0
        %1124 = vmatpush1.msra.mxu0 0.0
        %1125 = vmatprep.subr.mxu0 0.0
        %1126 = vmatpush1.msra.mxu0 0.0
        %1127 = vmatprep.subr.mxu0 0.0
        %1128 = vmatpush1.msra.mxu0 0.0
        %1129 = vmatprep.subr.mxu0 0.0
        %1130 = vmatpush1.msra.mxu0 0.0
        %1131 = vmatprep.subr.mxu0 0.0
        %1132 = vmatpush1.msra.mxu0 0.0
        %1133 = vmatprep.subr.mxu0 0.0
        %1134 = vmatpush1.msra.mxu0 0.0
        %1135 = vmatprep.subr.mxu0 0.0
        %1136 = vmatpush1.msra.mxu0 0.0
        %1137 = vmatprep.subr.mxu0 0.0
        %1138 = vmatpush1.msra.mxu0 0.0
        %1139 = vmatprep.subr.mxu0 0.0
        %1140 = vmatpush1.msra.mxu0 0.0
        %1141 = vmatprep.subr.mxu0 0.0
        %1142 = vmatpush1.msra.mxu0 0.0
        %1143 = vmatprep.subr.mxu0 0.0
        %1144 = vmatpush1.msra.mxu0 0.0
        %1145 = vmatprep.subr.mxu0 0.0
        %1146 = vmatpush1.msra.mxu0 0.0
        %1147 = vmatprep.subr.mxu0 0.0
        %1148 = vmatpush1.msra.mxu0 0.0
        %1149 = vmatprep.mubr.f32.mxu0 0.0
        %1150 = vmatmul.mubr.f32.gmra.mrb[0].mxu0 %v1083
        %v1151 = vpop.f32.mrb[0].mxu0
        %v1152 = vadd.f32 %v1079, %v1151
        %v1153 = vpop.f32.mrb[0].mxu0
        %1154 = vdwg.mxu0
        %v1155 = vadd.f32 %v980, %v1152
        %v1156 = vld [vmem:[%s12] sm:$0x1]
        %v1157 = vld [vmem:[%s13] sm:$0x1]
        %v1158 = vsel %vm545, %v1155, 0.0
        %v1159 = vrot.slane %v1158, 4
        %v1160 = vadd.f32 %v1158, %v1159
        %v1161 = vrot.slane %v1160, 2
        %v1162 = vadd.f32 %v1160, %v1161
        %v1163 = vrot.slane %v1162, 1
        %v1164 = vadd.f32 %v1162, %v1163
        %v1165 = vmul.f32 %v1164, 0.125
        %v1166 = vmul.f32 %v1155, %v1155
        %v1167 = vsel %vm545, %v1166, 0.0
        %v1168 = vrot.slane %v1167, 4
        %v1169 = vadd.f32 %v1167, %v1168
        %v1170 = vrot.slane %v1169, 2
        %v1171 = vadd.f32 %v1169, %v1170
        %v1172 = vrot.slane %v1171, 1
        %v1173 = vadd.f32 %v1171, %v1172
        %v1174 = vmul.f32 %v1173, 0.125
        %v1175 = vmul.f32 %v1165, %v1165
        %v1176 = vsub.f32 %v1174, %v1175
        %v1177 = vsub.f32 %v1155, %v1165
        %v1178 = vadd.f32 %v1176, 1e-05
        %v1179 = vrsqrt.pop %v1178
        %v1180 = vmul.f32 %v1177, %v1179
        %v1182 = vlaneseq
        %v1183 = vshrl.u32 %v1182, 7
        %v1184 = vsub.s32 0, %v1183
        %v1185 = vrot.slane %v1156, %v1184
        %v1187 = vmul.f32 %v1180, %v1185
        %v1189 = vlaneseq
        %v1190 = vshrl.u32 %v1189, 7
        %v1191 = vsub.s32 0, %v1190
        %v1192 = vrot.slane %v1157, %v1191
        %v1194 = vadd.f32 %v1187, %v1192
        %s1195 = sld [smem:[#allocation2 + $0x1]]
        %s1196 = scalar_lea.vmem %s5, 96
        %v1197 = vld [vmem:[%s1196] sm:$0xff]
        %v1198 = vld [vmem:[%s1196 + $0x8] sm:$0xff]
        %v1199 = vld [vmem:[%s1196 + $0x10] sm:$0xff]
        %v1200 = vld [vmem:[%s1196 + $0x18] sm:$0xff]
        %v1202 = vsel %vm545, %v1194, 0
        %1204 = vmatprep.subr.mxu0 0.0
        %1205 = vmatpush1.msra.mxu0 %v1197
        %1206 = vmatprep.subr.mxu0 0.0
        %1207 = vmatpush1.msra.mxu0 %v1198
        %1208 = vmatprep.subr.mxu0 0.0
        %1209 = vmatpush1.msra.mxu0 %v1199
        %1210 = vmatprep.subr.mxu0 0.0
        %1211 = vmatpush1.msra.mxu0 %v1200
        %1212 = vmatprep.subr.mxu0 0.0
        %1213 = vmatpush1.msra.mxu0 0.0
        %1214 = vmatprep.subr.mxu0 0.0
        %1215 = vmatpush1.msra.mxu0 0.0
        %1216 = vmatprep.subr.mxu0 0.0
        %1217 = vmatpush1.msra.mxu0 0.0
        %1218 = vmatprep.subr.mxu0 0.0
        %1219 = vmatpush1.msra.mxu0 0.0
        %1220 = vmatprep.subr.mxu0 0.0
        %1221 = vmatpush1.msra.mxu0 0.0
        %1222 = vmatprep.subr.mxu0 0.0
        %1223 = vmatpush1.msra.mxu0 0.0
        %1224 = vmatprep.subr.mxu0 0.0
        %1225 = vmatpush1.msra.mxu0 0.0
        %1226 = vmatprep.subr.mxu0 0.0
        %1227 = vmatpush1.msra.mxu0 0.0
        %1228 = vmatprep.subr.mxu0 0.0
        %1229 = vmatpush1.msra.mxu0 0.0
        %1230 = vmatprep.subr.mxu0 0.0
        %1231 = vmatpush1.msra.mxu0 0.0
        %1232 = vmatprep.subr.mxu0 0.0
        %1233 = vmatpush1.msra.mxu0 0.0
        %1234 = vmatprep.subr.mxu0 0.0
        %1235 = vmatpush1.msra.mxu0 0.0
        %1236 = vmatprep.subr.mxu0 0.0
        %1237 = vmatpush1.msra.mxu0 0.0
        %1238 = vmatprep.subr.mxu0 0.0
        %1239 = vmatpush1.msra.mxu0 0.0
        %1240 = vmatprep.subr.mxu0 0.0
        %1241 = vmatpush1.msra.mxu0 0.0
        %1242 = vmatprep.subr.mxu0 0.0
        %1243 = vmatpush1.msra.mxu0 0.0
        %1244 = vmatprep.subr.mxu0 0.0
        %1245 = vmatpush1.msra.mxu0 0.0
        %1246 = vmatprep.subr.mxu0 0.0
        %1247 = vmatpush1.msra.mxu0 0.0
        %1248 = vmatprep.subr.mxu0 0.0
        %1249 = vmatpush1.msra.mxu0 0.0
        %1250 = vmatprep.subr.mxu0 0.0
        %1251 = vmatpush1.msra.mxu0 0.0
        %1252 = vmatprep.subr.mxu0 0.0
        %1253 = vmatpush1.msra.mxu0 0.0
        %1254 = vmatprep.subr.mxu0 0.0
        %1255 = vmatpush1.msra.mxu0 0.0
        %1256 = vmatprep.subr.mxu0 0.0
        %1257 = vmatpush1.msra.mxu0 0.0
        %1258 = vmatprep.subr.mxu0 0.0
        %1259 = vmatpush1.msra.mxu0 0.0
        %1260 = vmatprep.subr.mxu0 0.0
        %1261 = vmatpush1.msra.mxu0 0.0
        %1262 = vmatprep.subr.mxu0 0.0
        %1263 = vmatpush1.msra.mxu0 0.0
        %1264 = vmatprep.subr.mxu0 0.0
        %1265 = vmatpush1.msra.mxu0 0.0
        %1266 = vmatprep.subr.mxu0 0.0
        %1267 = vmatpush1.msra.mxu0 0.0
        %1268 = vmatprep.mubr.f32.mxu0 0.0
        %1269 = vmatmul.mubr.f32.gmra.mrb[0].mxu0 %v1202
        %v1270 = vpop.f32.mrb[0].mxu0
        %v1271 = vadd.f32 0.0, %v1270
        %v1272 = vpop.f32.mrb[0].mxu0
        %1273 = vdwg.mxu0
        %s1274 = scalar_lea.vmem %s5, 128
        %v1275 = vld [vmem:[%s1274] sm:$0xff]
        %v1276 = vld [vmem:[%s1274 + $0x8] sm:$0xff]
        %v1277 = vld [vmem:[%s1274 + $0x10] sm:$0xff]
        %v1278 = vld [vmem:[%s1274 + $0x18] sm:$0xff]
        %1279 = vmatprep.subr.mxu0 0.0
        %1280 = vmatpush1.msra.mxu0 %v1275
        %1281 = vmatprep.subr.mxu0 0.0
        %1282 = vmatpush1.msra.mxu0 %v1276
        %1283 = vmatprep.subr.mxu0 0.0
        %1284 = vmatpush1.msra.mxu0 %v1277
        %1285 = vmatprep.subr.mxu0 0.0
        %1286 = vmatpush1.msra.mxu0 %v1278
        %1287 = vmatprep.subr.mxu0 0.0
        %1288 = vmatpush1.msra.mxu0 0.0
        %1289 = vmatprep.subr.mxu0 0.0
        %1290 = vmatpush1.msra.mxu0 0.0
        %1291 = vmatprep.subr.mxu0 0.0
        %1292 = vmatpush1.msra.mxu0 0.0
        %1293 = vmatprep.subr.mxu0 0.0
        %1294 = vmatpush1.msra.mxu0 0.0
        %1295 = vmatprep.subr.mxu0 0.0
        %1296 = vmatpush1.msra.mxu0 0.0
        %1297 = vmatprep.subr.mxu0 0.0
        %1298 = vmatpush1.msra.mxu0 0.0
        %1299 = vmatprep.subr.mxu0 0.0
        %1300 = vmatpush1.msra.mxu0 0.0
        %1301 = vmatprep.subr.mxu0 0.0
        %1302 = vmatpush1.msra.mxu0 0.0
        %1303 = vmatprep.subr.mxu0 0.0
        %1304 = vmatpush1.msra.mxu0 0.0
        %1305 = vmatprep.subr.mxu0 0.0
        %1306 = vmatpush1.msra.mxu0 0.0
        %1307 = vmatprep.subr.mxu0 0.0
        %1308 = vmatpush1.msra.mxu0 0.0
        %1309 = vmatprep.subr.mxu0 0.0
        %1310 = vmatpush1.msra.mxu0 0.0
        %1311 = vmatprep.subr.mxu0 0.0
        %1312 = vmatpush1.msra.mxu0 0.0
        %1313 = vmatprep.subr.mxu0 0.0
        %1314 = vmatpush1.msra.mxu0 0.0
        %1315 = vmatprep.subr.mxu0 0.0
        %1316 = vmatpush1.msra.mxu0 0.0
        %1317 = vmatprep.subr.mxu0 0.0
        %1318 = vmatpush1.msra.mxu0 0.0
        %1319 = vmatprep.subr.mxu0 0.0
        %1320 = vmatpush1.msra.mxu0 0.0
        %1321 = vmatprep.subr.mxu0 0.0
        %1322 = vmatpush1.msra.mxu0 0.0
        %1323 = vmatprep.subr.mxu0 0.0
        %1324 = vmatpush1.msra.mxu0 0.0
        %1325 = vmatprep.subr.mxu0 0.0
        %1326 = vmatpush1.msra.mxu0 0.0
        %1327 = vmatprep.subr.mxu0 0.0
        %1328 = vmatpush1.msra.mxu0 0.0
        %1329 = vmatprep.subr.mxu0 0.0
        %1330 = vmatpush1.msra.mxu0 0.0
        %1331 = vmatprep.subr.mxu0 0.0
        %1332 = vmatpush1.msra.mxu0 0.0
        %1333 = vmatprep.subr.mxu0 0.0
        %1334 = vmatpush1.msra.mxu0 0.0
        %1335 = vmatprep.subr.mxu0 0.0
        %1336 = vmatpush1.msra.mxu0 0.0
        %1337 = vmatprep.subr.mxu0 0.0
        %1338 = vmatpush1.msra.mxu0 0.0
        %1339 = vmatprep.subr.mxu0 0.0
        %1340 = vmatpush1.msra.mxu0 0.0
        %1341 = vmatprep.subr.mxu0 0.0
        %1342 = vmatpush1.msra.mxu0 0.0
        %1343 = vmatprep.mubr.f32.mxu0 0.0
        %1344 = vmatmul.mubr.f32.gmra.mrb[0].mxu0 %v1202
        %v1345 = vpop.f32.mrb[0].mxu0
        %v1346 = vadd.f32 0.0, %v1345
        %v1347 = vpop.f32.mrb[0].mxu0
        %1348 = vdwg.mxu0
        %s1349 = scalar_lea.vmem %s5, 160
        %v1350 = vld [vmem:[%s1349] sm:$0xff]
        %v1351 = vld [vmem:[%s1349 + $0x8] sm:$0xff]
        %v1352 = vld [vmem:[%s1349 + $0x10] sm:$0xff]
        %v1353 = vld [vmem:[%s1349 + $0x18] sm:$0xff]
        %1354 = vmatprep.subr.mxu0 0.0
        %1355 = vmatpush1.msra.mxu0 %v1350
        %1356 = vmatprep.subr.mxu0 0.0
        %1357 = vmatpush1.msra.mxu0 %v1351
        %1358 = vmatprep.subr.mxu0 0.0
        %1359 = vmatpush1.msra.mxu0 %v1352
        %1360 = vmatprep.subr.mxu0 0.0
        %1361 = vmatpush1.msra.mxu0 %v1353
        %1362 = vmatprep.subr.mxu0 0.0
        %1363 = vmatpush1.msra.mxu0 0.0
        %1364 = vmatprep.subr.mxu0 0.0
        %1365 = vmatpush1.msra.mxu0 0.0
        %1366 = vmatprep.subr.mxu0 0.0
        %1367 = vmatpush1.msra.mxu0 0.0
        %1368 = vmatprep.subr.mxu0 0.0
        %1369 = vmatpush1.msra.mxu0 0.0
        %1370 = vmatprep.subr.mxu0 0.0
        %1371 = vmatpush1.msra.mxu0 0.0
        %1372 = vmatprep.subr.mxu0 0.0
        %1373 = vmatpush1.msra.mxu0 0.0
        %1374 = vmatprep.subr.mxu0 0.0
        %1375 = vmatpush1.msra.mxu0 0.0
        %1376 = vmatprep.subr.mxu0 0.0
        %1377 = vmatpush1.msra.mxu0 0.0
        %1378 = vmatprep.subr.mxu0 0.0
        %1379 = vmatpush1.msra.mxu0 0.0
        %1380 = vmatprep.subr.mxu0 0.0
        %1381 = vmatpush1.msra.mxu0 0.0
        %1382 = vmatprep.subr.mxu0 0.0
        %1383 = vmatpush1.msra.mxu0 0.0
        %1384 = vmatprep.subr.mxu0 0.0
        %1385 = vmatpush1.msra.mxu0 0.0
        %1386 = vmatprep.subr.mxu0 0.0
        %1387 = vmatpush1.msra.mxu0 0.0
        %1388 = vmatprep.subr.mxu0 0.0
        %1389 = vmatpush1.msra.mxu0 0.0
        %1390 = vmatprep.subr.mxu0 0.0
        %1391 = vmatpush1.msra.mxu0 0.0
        %1392 = vmatprep.subr.mxu0 0.0
        %1393 = vmatpush1.msra.mxu0 0.0
        %1394 = vmatprep.subr.mxu0 0.0
        %1395 = vmatpush1.msra.mxu0 0.0
        %1396 = vmatprep.subr.mxu0 0.0
        %1397 = vmatpush1.msra.mxu0 0.0
        %1398 = vmatprep.subr.mxu0 0.0
        %1399 = vmatpush1.msra.mxu0 0.0
        %1400 = vmatprep.subr.mxu0 0.0
        %1401 = vmatpush1.msra.mxu0 0.0
        %1402 = vmatprep.subr.mxu0 0.0
        %1403 = vmatpush1.msra.mxu0 0.0
        %1404 = vmatprep.subr.mxu0 0.0
        %1405 = vmatpush1.msra.mxu0 0.0
        %1406 = vmatprep.subr.mxu0 0.0
        %1407 = vmatpush1.msra.mxu0 0.0
        %1408 = vmatprep.subr.mxu0 0.0
        %1409 = vmatpush1.msra.mxu0 0.0
        %1410 = vmatprep.subr.mxu0 0.0
        %1411 = vmatpush1.msra.mxu0 0.0
        %1412 = vmatprep.subr.mxu0 0.0
        %1413 = vmatpush1.msra.mxu0 0.0
        %1414 = vmatprep.subr.mxu0 0.0
        %1415 = vmatpush1.msra.mxu0 0.0
        %1416 = vmatprep.subr.mxu0 0.0
        %1417 = vmatpush1.msra.mxu0 0.0
        %1418 = vmatprep.mubr.f32.mxu0 0.0
        %1419 = vmatmul.mubr.f32.gmra.mrb[0].mxu0 %v1202
        %v1420 = vpop.f32.mrb[0].mxu0
        %v1421 = vadd.f32 0.0, %v1420
        %v1422 = vpop.f32.mrb[0].mxu0
        %1423 = vdwg.mxu0
        %v1424 = vstv %s1195
        %v1425 = vmul.f32 %v1424, %v510
        %v1426 = vsel %vm771, %v1425, -inf
        %1427 = vmax.xlane.f32.xlu0 %v1426
        %v1428 = vpop.xlane.xlu0 %1427
        %v1429 = vsub.f32 %v1425, %v1428
        %v1430 = vsel %vm545, %v1346, -inf
        %v1431 = vrot.slane %v1430, 4
        %v1432 = vmax.f32 %v1430, %v1431
        %v1433 = vrot.slane %v1432, 2
        %v1434 = vmax.f32 %v1432, %v1433
        %v1435 = vrot.slane %v1434, 1
        %v1436 = vmax.f32 %v1434, %v1435
        %v1437 = vsub.f32 %v1346, %v1436
        %v1438 = vmul.f32 %v1429, 1.442695
        %v1439 = vpow.pop %v1438
        %v1440 = vmul.f32 %v1437, 1.442695
        %v1441 = vpow.pop %v1440
        %v1442 = vmul.f32 %v1441, %v1421
        %v1444 = vsel %vm771, %v1439, 0
        %1446 = vmatprep.subr.mxu0 0.0
        %1447 = vmatpush1.msra.mxu0 %v1442
        %1448 = vmatprep.subr.mxu0 0.0
        %1449 = vmatpush1.msra.mxu0 0.0
        %1450 = vmatprep.subr.mxu0 0.0
        %1451 = vmatpush1.msra.mxu0 0.0
        %1452 = vmatprep.subr.mxu0 0.0
        %1453 = vmatpush1.msra.mxu0 0.0
        %1454 = vmatprep.subr.mxu0 0.0
        %1455 = vmatpush1.msra.mxu0 0.0
        %1456 = vmatprep.subr.mxu0 0.0
        %1457 = vmatpush1.msra.mxu0 0.0
        %1458 = vmatprep.subr.mxu0 0.0
        %1459 = vmatpush1.msra.mxu0 0.0
        %1460 = vmatprep.subr.mxu0 0.0
        %1461 = vmatpush1.msra.mxu0 0.0
        %1462 = vmatprep.subr.mxu0 0.0
        %1463 = vmatpush1.msra.mxu0 0.0
        %1464 = vmatprep.subr.mxu0 0.0
        %1465 = vmatpush1.msra.mxu0 0.0
        %1466 = vmatprep.subr.mxu0 0.0
        %1467 = vmatpush1.msra.mxu0 0.0
        %1468 = vmatprep.subr.mxu0 0.0
        %1469 = vmatpush1.msra.mxu0 0.0
        %1470 = vmatprep.subr.mxu0 0.0
        %1471 = vmatpush1.msra.mxu0 0.0
        %1472 = vmatprep.subr.mxu0 0.0
        %1473 = vmatpush1.msra.mxu0 0.0
        %1474 = vmatprep.subr.mxu0 0.0
        %1475 = vmatpush1.msra.mxu0 0.0
        %1476 = vmatprep.subr.mxu0 0.0
        %1477 = vmatpush1.msra.mxu0 0.0
        %1478 = vmatprep.subr.mxu0 0.0
        %1479 = vmatpush1.msra.mxu0 0.0
        %1480 = vmatprep.subr.mxu0 0.0
        %1481 = vmatpush1.msra.mxu0 0.0
        %1482 = vmatprep.subr.mxu0 0.0
        %1483 = vmatpush1.msra.mxu0 0.0
        %1484 = vmatprep.subr.mxu0 0.0
        %1485 = vmatpush1.msra.mxu0 0.0
        %1486 = vmatprep.subr.mxu0 0.0
        %1487 = vmatpush1.msra.mxu0 0.0
        %1488 = vmatprep.subr.mxu0 0.0
        %1489 = vmatpush1.msra.mxu0 0.0
        %1490 = vmatprep.subr.mxu0 0.0
        %1491 = vmatpush1.msra.mxu0 0.0
        %1492 = vmatprep.subr.mxu0 0.0
        %1493 = vmatpush1.msra.mxu0 0.0
        %1494 = vmatprep.subr.mxu0 0.0
        %1495 = vmatpush1.msra.mxu0 0.0
        %1496 = vmatprep.subr.mxu0 0.0
        %1497 = vmatpush1.msra.mxu0 0.0
        %1498 = vmatprep.subr.mxu0 0.0
        %1499 = vmatpush1.msra.mxu0 0.0
        %1500 = vmatprep.subr.mxu0 0.0
        %1501 = vmatpush1.msra.mxu0 0.0
        %1502 = vmatprep.subr.mxu0 0.0
        %1503 = vmatpush1.msra.mxu0 0.0
        %1504 = vmatprep.subr.mxu0 0.0
        %1505 = vmatpush1.msra.mxu0 0.0
        %1506 = vmatprep.subr.mxu0 0.0
        %1507 = vmatpush1.msra.mxu0 0.0
        %1508 = vmatprep.subr.mxu0 0.0
        %1509 = vmatpush1.msra.mxu0 0.0
        %1510 = vmatprep.mubr.f32.mxu0 0.0
        %1511 = vmatmul.mubr.f32.gmra.mrb[0].mxu0 %v1444
        %v1512 = vpop.f32.mrb[0].mxu0
        %v1513 = vadd.f32 0.0, %v1512
        %v1514 = vpop.f32.mrb[0].mxu0
        %1515 = vdwg.mxu0
        %1516 = vmatprep.subr.mxu0 0.0
        %1517 = vmatpush1.msra.mxu0 %v1441
        %1518 = vmatprep.subr.mxu0 0.0
        %1519 = vmatpush1.msra.mxu0 0.0
        %1520 = vmatprep.subr.mxu0 0.0
        %1521 = vmatpush1.msra.mxu0 0.0
        %1522 = vmatprep.subr.mxu0 0.0
        %1523 = vmatpush1.msra.mxu0 0.0
        %1524 = vmatprep.subr.mxu0 0.0
        %1525 = vmatpush1.msra.mxu0 0.0
        %1526 = vmatprep.subr.mxu0 0.0
        %1527 = vmatpush1.msra.mxu0 0.0
        %1528 = vmatprep.subr.mxu0 0.0
        %1529 = vmatpush1.msra.mxu0 0.0
        %1530 = vmatprep.subr.mxu0 0.0
        %1531 = vmatpush1.msra.mxu0 0.0
        %1532 = vmatprep.subr.mxu0 0.0
        %1533 = vmatpush1.msra.mxu0 0.0
        %1534 = vmatprep.subr.mxu0 0.0
        %1535 = vmatpush1.msra.mxu0 0.0
        %1536 = vmatprep.subr.mxu0 0.0
        %1537 = vmatpush1.msra.mxu0 0.0
        %1538 = vmatprep.subr.mxu0 0.0
        %1539 = vmatpush1.msra.mxu0 0.0
        %1540 = vmatprep.subr.mxu0 0.0
        %1541 = vmatpush1.msra.mxu0 0.0
        %1542 = vmatprep.subr.mxu0 0.0
        %1543 = vmatpush1.msra.mxu0 0.0
        %1544 = vmatprep.subr.mxu0 0.0
        %1545 = vmatpush1.msra.mxu0 0.0
        %1546 = vmatprep.subr.mxu0 0.0
        %1547 = vmatpush1.msra.mxu0 0.0
        %1548 = vmatprep.subr.mxu0 0.0
        %1549 = vmatpush1.msra.mxu0 0.0
        %1550 = vmatprep.subr.mxu0 0.0
        %1551 = vmatpush1.msra.mxu0 0.0
        %1552 = vmatprep.subr.mxu0 0.0
        %1553 = vmatpush1.msra.mxu0 0.0
        %1554 = vmatprep.subr.mxu0 0.0
        %1555 = vmatpush1.msra.mxu0 0.0
        %1556 = vmatprep.subr.mxu0 0.0
        %1557 = vmatpush1.msra.mxu0 0.0
        %1558 = vmatprep.subr.mxu0 0.0
        %1559 = vmatpush1.msra.mxu0 0.0
        %1560 = vmatprep.subr.mxu0 0.0
        %1561 = vmatpush1.msra.mxu0 0.0
        %1562 = vmatprep.subr.mxu0 0.0
        %1563 = vmatpush1.msra.mxu0 0.0
        %1564 = vmatprep.subr.mxu0 0.0
        %1565 = vmatpush1.msra.mxu0 0.0
        %1566 = vmatprep.subr.mxu0 0.0
        %1567 = vmatpush1.msra.mxu0 0.0
        %1568 = vmatprep.subr.mxu0 0.0
        %1569 = vmatpush1.msra.mxu0 0.0
        %1570 = vmatprep.subr.mxu0 0.0
        %1571 = vmatpush1.msra.mxu0 0.0
        %1572 = vmatprep.subr.mxu0 0.0
        %1573 = vmatpush1.msra.mxu0 0.0
        %1574 = vmatprep.subr.mxu0 0.0
        %1575 = vmatpush1.msra.mxu0 0.0
        %1576 = vmatprep.subr.mxu0 0.0
        %1577 = vmatpush1.msra.mxu0 0.0
        %1578 = vmatprep.subr.mxu0 0.0
        %1579 = vmatpush1.msra.mxu0 0.0
        %1580 = vmatprep.mubr.f32.mxu0 0.0
        %1581 = vmatmul.mubr.f32.gmra.mrb[0].mxu0 %v1444
        %v1582 = vpop.f32.mrb[0].mxu0
        %v1583 = vadd.f32 0.0, %v1582
        %v1584 = vpop.f32.mrb[0].mxu0
        %1585 = vdwg.mxu0
        %v1586 = vxor.u32 %v1271, 2147483648
        %v1587 = vmul.f32 %v1586, 1.442695
        %v1588 = vpow.pop %v1587
        %v1589 = vadd.f32 %v1588, 1.0
        %v1590 = vrcp.pop %v1589
        %v1591 = vmul.f32 1.0, %v1590
        %v1592 = vrcp.pop %v1583
        %v1593 = vmul.f32 %v1513, %v1592
        %v1594 = vmul.f32 %v1591, %v1593
        %v1595 = vadd.f32 %v1194, %v1594
        %s1596 = scalar_lea.vmem %s6, 1
        %v1597 = vld [vmem:[%s1596] sm:$0x1]
        %s1598 = scalar_lea.vmem %s7, 1
        %v1599 = vld [vmem:[%s1598] sm:$0x1]
        %v1600 = vsel %vm545, %v1595, 0.0
        %v1601 = vrot.slane %v1600, 4
        %v1602 = vadd.f32 %v1600, %v1601
        %v1603 = vrot.slane %v1602, 2
        %v1604 = vadd.f32 %v1602, %v1603
        %v1605 = vrot.slane %v1604, 1
        %v1606 = vadd.f32 %v1604, %v1605
        %v1607 = vmul.f32 %v1606, 0.125
        %v1608 = vmul.f32 %v1595, %v1595
        %v1609 = vsel %vm545, %v1608, 0.0
        %v1610 = vrot.slane %v1609, 4
        %v1611 = vadd.f32 %v1609, %v1610
        %v1612 = vrot.slane %v1611, 2
        %v1613 = vadd.f32 %v1611, %v1612
        %v1614 = vrot.slane %v1613, 1
        %v1615 = vadd.f32 %v1613, %v1614
        %v1616 = vmul.f32 %v1615, 0.125
        %v1617 = vmul.f32 %v1607, %v1607
        %v1618 = vsub.f32 %v1616, %v1617
        %v1619 = vsub.f32 %v1595, %v1607
        %v1620 = vadd.f32 %v1618, 1e-05
        %v1621 = vrsqrt.pop %v1620
        %v1622 = vmul.f32 %v1619, %v1621
        %v1624 = vlaneseq
        %v1625 = vshrl.u32 %v1624, 7
        %v1626 = vsub.s32 0, %v1625
        %v1627 = vrot.slane %v1597, %v1626
        %v1629 = vmul.f32 %v1622, %v1627
        %v1631 = vlaneseq
        %v1632 = vshrl.u32 %v1631, 7
        %v1633 = vsub.s32 0, %v1632
        %v1634 = vrot.slane %v1599, %v1633
        %v1636 = vadd.f32 %v1629, %v1634
        %s1637 = scalar_lea.vmem [#allocation6], 32
        %v1638 = vld [vmem:[%s1637] sm:$0xff]
        %v1639 = vld [vmem:[%s1637 + $0x8] sm:$0xff]
        %v1640 = vld [vmem:[%s1637 + $0x10] sm:$0xff]
        %v1641 = vld [vmem:[%s1637 + $0x18] sm:$0xff]
        %s1642 = scalar_lea.vmem %s9, 1
        %v1643 = vld [vmem:[%s1642] sm:$0x1]
        %v1645 = vlaneseq
        %v1646 = vshrl.u32 %v1645, 7
        %v1647 = vsub.s32 0, %v1646
        %v1648 = vrot.slane %v1643, %v1647
        %v1651 = vsel %vm545, %v1636, 0
        %1653 = vmatprep.subr.mxu0 0.0
        %1654 = vmatpush1.msra.mxu0 %v1638
        %1655 = vmatprep.subr.mxu0 0.0
        %1656 = vmatpush1.msra.mxu0 %v1639
        %1657 = vmatprep.subr.mxu0 0.0
        %1658 = vmatpush1.msra.mxu0 %v1640
        %1659 = vmatprep.subr.mxu0 0.0
        %1660 = vmatpush1.msra.mxu0 %v1641
        %1661 = vmatprep.subr.mxu0 0.0
        %1662 = vmatpush1.msra.mxu0 0.0
        %1663 = vmatprep.subr.mxu0 0.0
        %1664 = vmatpush1.msra.mxu0 0.0
        %1665 = vmatprep.subr.mxu0 0.0
        %1666 = vmatpush1.msra.mxu0 0.0
        %1667 = vmatprep.subr.mxu0 0.0
        %1668 = vmatpush1.msra.mxu0 0.0
        %1669 = vmatprep.subr.mxu0 0.0
        %1670 = vmatpush1.msra.mxu0 0.0
        %1671 = vmatprep.subr.mxu0 0.0
        %1672 = vmatpush1.msra.mxu0 0.0
        %1673 = vmatprep.subr.mxu0 0.0
        %1674 = vmatpush1.msra.mxu0 0.0
        %1675 = vmatprep.subr.mxu0 0.0
        %1676 = vmatpush1.msra.mxu0 0.0
        %1677 = vmatprep.subr.mxu0 0.0
        %1678 = vmatpush1.msra.mxu0 0.0
        %1679 = vmatprep.subr.mxu0 0.0
        %1680 = vmatpush1.msra.mxu0 0.0
        %1681 = vmatprep.subr.mxu0 0.0
        %1682 = vmatpush1.msra.mxu0 0.0
        %1683 = vmatprep.subr.mxu0 0.0
        %1684 = vmatpush1.msra.mxu0 0.0
        %1685 = vmatprep.subr.mxu0 0.0
        %1686 = vmatpush1.msra.mxu0 0.0
        %1687 = vmatprep.subr.mxu0 0.0
        %1688 = vmatpush1.msra.mxu0 0.0
        %1689 = vmatprep.subr.mxu0 0.0
        %1690 = vmatpush1.msra.mxu0 0.0
        %1691 = vmatprep.subr.mxu0 0.0
        %1692 = vmatpush1.msra.mxu0 0.0
        %1693 = vmatprep.subr.mxu0 0.0
        %1694 = vmatpush1.msra.mxu0 0.0
        %1695 = vmatprep.subr.mxu0 0.0
        %1696 = vmatpush1.msra.mxu0 0.0
        %1697 = vmatprep.subr.mxu0 0.0
        %1698 = vmatpush1.msra.mxu0 0.0
        %1699 = vmatprep.subr.mxu0 0.0
        %1700 = vmatpush1.msra.mxu0 0.0
        %1701 = vmatprep.subr.mxu0 0.0
        %1702 = vmatpush1.msra.mxu0 0.0
        %1703 = vmatprep.subr.mxu0 0.0
        %1704 = vmatpush1.msra.mxu0 0.0
        %1705 = vmatprep.subr.mxu0 0.0
        %1706 = vmatpush1.msra.mxu0 0.0
        %1707 = vmatprep.subr.mxu0 0.0
        %1708 = vmatpush1.msra.mxu0 0.0
        %1709 = vmatprep.subr.mxu0 0.0
        %1710 = vmatpush1.msra.mxu0 0.0
        %1711 = vmatprep.subr.mxu0 0.0
        %1712 = vmatpush1.msra.mxu0 0.0
        %1713 = vmatprep.subr.mxu0 0.0
        %1714 = vmatpush1.msra.mxu0 0.0
        %1715 = vmatprep.subr.mxu0 0.0
        %1716 = vmatpush1.msra.mxu0 0.0
        %1717 = vmatprep.mubr.f32.mxu0 0.0
        %1718 = vmatmul.mubr.f32.gmra.mrb[0].mxu0 %v1651
        %v1719 = vpop.f32.mrb[0].mxu0
        %v1720 = vadd.f32 %v1648, %v1719
        %v1721 = vpop.f32.mrb[0].mxu0
        %1722 = vdwg.mxu0
        %v1723 = vmax.f32 %v1720, 0.0
        %s1724 = scalar_lea.vmem %s10, 64
        %v1725 = vld [vmem:[%s1724] sm:$0xff]
        %v1726 = vld [vmem:[%s1724 + $0x8] sm:$0xff]
        %v1727 = vld [vmem:[%s1724 + $0x10] sm:$0xff]
        %v1728 = vld [vmem:[%s1724 + $0x18] sm:$0xff]
        %v1729 = vld [vmem:[%s1724 + $0x20] sm:$0xff]
        %v1730 = vld [vmem:[%s1724 + $0x28] sm:$0xff]
        %v1731 = vld [vmem:[%s1724 + $0x30] sm:$0xff]
        %v1732 = vld [vmem:[%s1724 + $0x38] sm:$0xff]
        %s1733 = scalar_lea.vmem %s11, 1
        %v1734 = vld [vmem:[%s1733] sm:$0x1]
        %v1736 = vlaneseq
        %v1737 = vshrl.u32 %v1736, 7
        %v1738 = vsub.s32 0, %v1737
        %v1739 = vrot.slane %v1734, %v1738
        %v1742 = vsel %vm1081, %v1723, 0
        %1744 = vmatprep.subr.mxu0 0.0
        %1745 = vmatpush1.msra.mxu0 %v1725
        %1746 = vmatprep.subr.mxu0 0.0
        %1747 = vmatpush1.msra.mxu0 %v1726
        %1748 = vmatprep.subr.mxu0 0.0
        %1749 = vmatpush1.msra.mxu0 %v1727
        %1750 = vmatprep.subr.mxu0 0.0
        %1751 = vmatpush1.msra.mxu0 %v1728
        %1752 = vmatprep.subr.mxu0 0.0
        %1753 = vmatpush1.msra.mxu0 %v1729
        %1754 = vmatprep.subr.mxu0 0.0
        %1755 = vmatpush1.msra.mxu0 %v1730
        %1756 = vmatprep.subr.mxu0 0.0
        %1757 = vmatpush1.msra.mxu0 %v1731
        %1758 = vmatprep.subr.mxu0 0.0
        %1759 = vmatpush1.msra.mxu0 %v1732
        %1760 = vmatprep.subr.mxu0 0.0
        %1761 = vmatpush1.msra.mxu0 0.0
        %1762 = vmatprep.subr.mxu0 0.0
        %1763 = vmatpush1.msra.mxu0 0.0
        %1764 = vmatprep.subr.mxu0 0.0
        %1765 = vmatpush1.msra.mxu0 0.0
        %1766 = vmatprep.subr.mxu0 0.0
        %1767 = vmatpush1.msra.mxu0 0.0
        %1768 = vmatprep.subr.mxu0 0.0
        %1769 = vmatpush1.msra.mxu0 0.0
        %1770 = vmatprep.subr.mxu0 0.0
        %1771 = vmatpush1.msra.mxu0 0.0
        %1772 = vmatprep.subr.mxu0 0.0
        %1773 = vmatpush1.msra.mxu0 0.0
        %1774 = vmatprep.subr.mxu0 0.0
        %1775 = vmatpush1.msra.mxu0 0.0
        %1776 = vmatprep.subr.mxu0 0.0
        %1777 = vmatpush1.msra.mxu0 0.0
        %1778 = vmatprep.subr.mxu0 0.0
        %1779 = vmatpush1.msra.mxu0 0.0
        %1780 = vmatprep.subr.mxu0 0.0
        %1781 = vmatpush1.msra.mxu0 0.0
        %1782 = vmatprep.subr.mxu0 0.0
        %1783 = vmatpush1.msra.mxu0 0.0
        %1784 = vmatprep.subr.mxu0 0.0
        %1785 = vmatpush1.msra.mxu0 0.0
        %1786 = vmatprep.subr.mxu0 0.0
        %1787 = vmatpush1.msra.mxu0 0.0
        %1788 = vmatprep.subr.mxu0 0.0
        %1789 = vmatpush1.msra.mxu0 0.0
        %1790 = vmatprep.subr.mxu0 0.0
        %1791 = vmatpush1.msra.mxu0 0.0
        %1792 = vmatprep.subr.mxu0 0.0
        %1793 = vmatpush1.msra.mxu0 0.0
        %1794 = vmatprep.subr.mxu0 0.0
        %1795 = vmatpush1.msra.mxu0 0.0
        %1796 = vmatprep.subr.mxu0 0.0
        %1797 = vmatpush1.msra.mxu0 0.0
        %1798 = vmatprep.subr.mxu0 0.0
        %1799 = vmatpush1.msra.mxu0 0.0
        %1800 = vmatprep.subr.mxu0 0.0
        %1801 = vmatpush1.msra.mxu0 0.0
        %1802 = vmatprep.subr.mxu0 0.0
        %1803 = vmatpush1.msra.mxu0 0.0
        %1804 = vmatprep.subr.mxu0 0.0
        %1805 = vmatpush1.msra.mxu0 0.0
        %1806 = vmatprep.subr.mxu0 0.0
        %1807 = vmatpush1.msra.mxu0 0.0
        %1808 = vmatprep.mubr.f32.mxu0 0.0
        %1809 = vmatmul.mubr.f32.gmra.mrb[0].mxu0 %v1742
        %v1810 = vpop.f32.mrb[0].mxu0
        %v1811 = vadd.f32 %v1739, %v1810
        %v1812 = vpop.f32.mrb[0].mxu0
        %1813 = vdwg.mxu0
        %v1814 = vadd.f32 %v1636, %v1811
        %s1815 = scalar_lea.vmem %s12, 1
        %v1816 = vld [vmem:[%s1815] sm:$0x1]
        %s1817 = scalar_lea.vmem %s13, 1
        %v1818 = vld [vmem:[%s1817] sm:$0x1]
        %v1819 = vsel %vm545, %v1814, 0.0
        %v1820 = vrot.slane %v1819, 4
        %v1821 = vadd.f32 %v1819, %v1820
        %v1822 = vrot.slane %v1821, 2
        %v1823 = vadd.f32 %v1821, %v1822
        %v1824 = vrot.slane %v1823, 1
        %v1825 = vadd.f32 %v1823, %v1824
        %v1826 = vmul.f32 %v1825, 0.125
        %v1827 = vmul.f32 %v1814, %v1814
        %v1828 = vsel %vm545, %v1827, 0.0
        %v1829 = vrot.slane %v1828, 4
        %v1830 = vadd.f32 %v1828, %v1829
        %v1831 = vrot.slane %v1830, 2
        %v1832 = vadd.f32 %v1830, %v1831
        %v1833 = vrot.slane %v1832, 1
        %v1834 = vadd.f32 %v1832, %v1833
        %v1835 = vmul.f32 %v1834, 0.125
        %v1836 = vmul.f32 %v1826, %v1826
        %v1837 = vsub.f32 %v1835, %v1836
        %v1838 = vsub.f32 %v1814, %v1826
        %v1839 = vadd.f32 %v1837, 1e-05
        %v1840 = vrsqrt.pop %v1839
        %v1841 = vmul.f32 %v1838, %v1840
        %v1843 = vlaneseq
        %v1844 = vshrl.u32 %v1843, 7
        %v1845 = vsub.s32 0, %v1844
        %v1846 = vrot.slane %v1816, %v1845
        %v1848 = vmul.f32 %v1841, %v1846
        %v1850 = vlaneseq
        %v1851 = vshrl.u32 %v1850, 7
        %v1852 = vsub.s32 0, %v1851
        %v1853 = vrot.slane %v1818, %v1852
        %v1855 = vadd.f32 %v1848, %v1853
        %1856 = vst.msk [vmem:[%s500] sm:$0xff] %vm545, %v1855
        %s1857 = sand.u32 %s342, 1
        %s1858 = scalar_lea.sflag [#allocation4], %s1857
        %s1859 = sand.u32 %s342, 1
        %s1860 = smul.addr %s1859, 8
        %s1861 = scalar_lea.vmem [#allocation7], %s1860
        // Predicated region
        $region85: #{tpu_custom_call.1} parent=75 // pred_check
          %p1862 = pneg %p352
        $region86: #{tpu_custom_call.1} parent=75 // pred_check_branch
          %1864 = sbr.rel (%p1862) target = $region88
        $region87: #{tpu_custom_call.1} parent=75 // pred_region
          %s1866 = ssub.s32 128, 128
          %1867 = vsyncadd %s1858, %s1866
          %s1868 = smul.addr %s30, 128
          %s1869 = scalar_lea.hbm %s14, %s1868
          %s1871 = sshll.u32 %s1861, 4
          %s1872 = int_to_ptr.vmem [resolvable:$true] %s1871
          %1874 = dma.vmem_to_hbm [thread:$0]  %s1872, 128, %s1869, %s1858
        $region88: #{tpu_custom_call.1} parent=75 // pred_fallthru
          _
      $region76: #{tpu_custom_call.1} parent=5 // pred_fallthru
        _
      %p1875 = scmp.le.s32.totalorder 2, %s25
      // Predicated region
      $region89: #{tpu_custom_call.1} parent=5 // pred_check
        %p1876 = pneg %p1875
      $region90: #{tpu_custom_call.1} parent=5 // pred_check_branch
        %1878 = sbr.rel (%p1876) target = $region92
      $region91: #{tpu_custom_call.1} parent=5 // pred_region
        %s1879 = ssub.s32 %s25, 2
        // Predicated region
        $region93: #{tpu_custom_call.1} parent=91 // pred_check
          %p1880 = pneg %p358
        $region94: #{tpu_custom_call.1} parent=91 // pred_check_branch
          %1882 = sbr.rel (%p1880) target = $region96
        $region95: #{tpu_custom_call.1} parent=91 // pred_region
          %s1883 = sand.u32 %s343, 1
          %s1884 = scalar_lea.sflag [#allocation4], %s1883
          %s1885 = sand.u32 %s343, 1
          %s1886 = smul.addr %s1885, 8
          %s1887 = scalar_lea.vmem [#allocation7], %s1886
          %1888 = dma.done %s1884, 128
        $region96: #{tpu_custom_call.1} parent=91 // pred_fallthru
          _
      $region92: #{tpu_custom_call.1} parent=5 // pred_fallthru
        _
    $region6: #{tpu_custom_call.1} parent=1 // loop_footer
      %s29 = sadd.s32 1, %s25
    $region7: #{tpu_custom_call.1} parent=1 // loop_footer_branch
      %24 = sbr.rel target = $region3
    $region8: #{tpu_custom_call.1} parent=1 // loop_exit
      _
    %1889 = vsyncpa [#allocation3], 1
    %s1890 = scalar_lea.sflag [#allocation3], 1
    %1891 = vsyncpa %s1890, 1
    %1892 = vsyncpa [#allocation4], 1
    %s1893 = scalar_lea.sflag [#allocation4], 1
    %1894 = vsyncpa %s1893, 1
    %1895 = vsyncpa [#allocation5], 1
    %s1896 = scalar_lea.sflag [#allocation5], 1
    %1897 = vsyncpa %s1896, 1

</llo_original>
